<compile_context>
chip_gen: v7x
topology: tpu7x:2x2x1
jax: 0.10.0
libtpu: 0.0.40
codegen_flags: <defaults>
</compile_context>

<pallas_src>
import jax
import jax.numpy as jnp
from jax.experimental import pallas as pl

# -------------------- tiny synthetic Swin config --------------------
B = 2                       # batch
C_IN = 4                    # input channels (NCHW)
IMG = 16                    # H = W
PATCH = 4                   # patch size -> 4x4 grid of patches
GRID = IMG // PATCH         # 4
N_PATCH = GRID * GRID       # 16 tokens (== one attention window)
BN = B * N_PATCH            # 32 token rows
PATCH_DIM = C_IN * PATCH * PATCH   # 64
EMBED = 32                  # swin_encoder.num_features
HEADS = 2
HEAD_DIM = EMBED // HEADS   # 16
MLP_HIDDEN = 4 * EMBED      # 128
NUM_CLASSES = 5
EPS = 1e-5
NEG_INF = -1e9

LANES = 128
OUT_ROWS = 8                # sublane-dense output block (>= B)

# ---- bf16 weight slab row layout ([WSLAB_ROWS, 128]) ----
W_PATCH = 0                         # [PATCH_DIM, EMBED]
W_QKV = W_PATCH + PATCH_DIM         # 64:  [EMBED, 3*EMBED]
W_PROJ = W_QKV + EMBED              # 96:  [EMBED, EMBED]
W_MLP1 = W_PROJ + EMBED             # 128: [EMBED, MLP_HIDDEN]
W_MLP2 = W_MLP1 + EMBED             # 160: [MLP_HIDDEN, EMBED]
W_CLS = W_MLP2 + MLP_HIDDEN         # 288: [EMBED, 128] (lane padded classifier)
WSLAB_ROWS = W_CLS + EMBED          # 320

# ---- f32 aux slab row layout ([AUX_ROWS, 128]) ----
(ROW_PATCH_B, ROW_EMB_G, ROW_EMB_B, ROW_LN1_G, ROW_LN1_B, ROW_BQKV,
 ROW_BPROJ, ROW_LN2_G, ROW_LN2_B, ROW_B1, ROW_B2, ROW_FLN_G, ROW_FLN_B,
 ROW_CLS_B) = range(14)
ROW_MASK = 16                       # HEADS blocks of [BN, BN] relbias + block-diag mask
ROW_POOL = ROW_MASK + HEADS * BN    # 80: [OUT_ROWS, BN] mean-pool matrix
AUX_ROWS = ROW_POOL + OUT_ROWS      # 88


def _layernorm(x, g, b):
    mu = jnp.mean(x, axis=-1, keepdims=True)
    var = jnp.mean((x - mu) ** 2, axis=-1, keepdims=True)
    return (x - mu) * jax.lax.rsqrt(var + EPS) * g + b


# -------------------- single fused kernel --------------------
def swin_fused_kernel(patches_ref, wslab_ref, aux_ref, o_ref):
    f32 = jnp.float32
    bf16 = jnp.bfloat16

    w = wslab_ref[...]                                       # [320, 128] bf16
    aux = aux_ref[...]                                       # [88, 128]  f32

    def vec(row, width=EMBED):
        return aux[row:row + 1, :width]                      # [1, width] f32

    patch_w = w[W_PATCH:W_PATCH + PATCH_DIM, :EMBED]         # [64, 32]
    wqkv = w[W_QKV:W_QKV + EMBED, :3 * EMBED]                # [32, 96]
    wproj = w[W_PROJ:W_PROJ + EMBED, :EMBED]                 # [32, 32]
    w1 = w[W_MLP1:W_MLP1 + EMBED, :MLP_HIDDEN]               # [32, 128]
    w2 = w[W_MLP2:W_MLP2 + MLP_HIDDEN, :EMBED]               # [128, 32]
    clsw = w[W_CLS:W_CLS + EMBED, :]                         # [32, 128] lane padded

    # ---- patch embedding + embedding LayerNorm -----------------------------
    emb = jnp.dot(patches_ref[...], patch_w, preferred_element_type=f32)
    emb = emb + vec(ROW_PATCH_B)                             # [32, 32]
    x = _layernorm(emb, vec(ROW_EMB_G), vec(ROW_EMB_B))      # f32 residual stream

    # ---- window multi-head self attention -----------------------------------
    h1 = _layernorm(x, vec(ROW_LN1_G), vec(ROW_LN1_B)).astype(bf16)
    qkv = jnp.dot(h1, wqkv, preferred_element_type=f32) + vec(ROW_BQKV, 3 * EMBED)

    scale = 1.0 / (HEAD_DIM ** 0.5)
    attn = jnp.zeros((BN, EMBED), f32)
    for h in range(HEADS):                                   # unrolled (HEADS == 2)
        qh = qkv[:, h * HEAD_DIM:(h + 1) * HEAD_DIM]                     # [32, 16]
        kh = qkv[:, EMBED + h * HEAD_DIM:EMBED + (h + 1) * HEAD_DIM]     # [32, 16]
        vh = qkv[:, 2 * EMBED + h * HEAD_DIM:2 * EMBED + (h + 1) * HEAD_DIM]

        # scores over all 32 tokens; cross-batch 16x16 blocks pre-masked to -1e9
        s = jax.lax.dot_general(qh, kh, (((1,), (1,)), ((), ())),
                                preferred_element_type=f32) * scale      # [32, 32]
        s = s + aux[ROW_MASK + h * BN:ROW_MASK + (h + 1) * BN, :BN]      # bias + mask
        s = s - jnp.max(s, axis=-1, keepdims=True)
        p = jnp.exp(s)
        p = p * pl.reciprocal(jnp.sum(p, axis=-1, keepdims=True), approx=True)

        ctx = jnp.dot(p, vh, preferred_element_type=f32)                 # [32, 16]
        attn = attn + jnp.dot(ctx.astype(bf16),
                              wproj[h * HEAD_DIM:(h + 1) * HEAD_DIM, :],
                              preferred_element_type=f32)                # [32, 32]

    x = x + attn + vec(ROW_BPROJ)

    # ---- MLP ----------------------------------------------------------------
    h2 = _layernorm(x, vec(ROW_LN2_G), vec(ROW_LN2_B)).astype(bf16)
    m = jnp.dot(h2, w1, preferred_element_type=f32) + vec(ROW_B1, MLP_HIDDEN)
    m = jax.nn.gelu(m, approximate=True).astype(bf16)
    m = jnp.dot(m, w2, preferred_element_type=f32) + vec(ROW_B2)
    x = x + m

    # ---- final LayerNorm + mean pool (as matmul) + classifier ---------------
    hf = _layernorm(x, vec(ROW_FLN_G), vec(ROW_FLN_B))       # [32, 32] f32
    pool_mat = aux[ROW_POOL:ROW_POOL + OUT_ROWS, :BN]        # [8, 32] f32
    pooled = jnp.dot(pool_mat, hf, preferred_element_type=f32)           # [8, 32]
    logits = jnp.dot(pooled.astype(bf16), clsw, preferred_element_type=f32)
    logits = logits + aux[ROW_CLS_B:ROW_CLS_B + 1, :]        # [8, 128]
    o_ref[...] = logits                                      # unmasked dense store


# -------------------- parameter init (deterministic) --------------------
def init_params(key):
    ks = jax.random.split(key, 18)
    std = 0.02
    p = {
        "patch_w": jax.random.normal(ks[0], (PATCH_DIM, EMBED), jnp.float32) * std,
        "patch_b": jax.random.normal(ks[1], (1, EMBED), jnp.float32) * std,
        "emb_ln_g": 1.0 + jax.random.normal(ks[2], (1, EMBED), jnp.float32) * std,
        "emb_ln_b": jax.random.normal(ks[3], (1, EMBED), jnp.float32) * std,
        "ln1_g": 1.0 + jax.random.normal(ks[4], (1, EMBED), jnp.float32) * std,
        "ln1_b": jax.random.normal(ks[5], (1, EMBED), jnp.float32) * std,
        "wqkv": jax.random.normal(ks[6], (EMBED, 3 * EMBED), jnp.float32) * std,
        "bqkv": jax.random.normal(ks[7], (1, 3 * EMBED), jnp.float32) * std,
        "wproj": jax.random.normal(ks[8], (EMBED, EMBED), jnp.float32) * std,
        "bproj": jax.random.normal(ks[9], (1, EMBED), jnp.float32) * std,
        "relbias": jax.random.normal(ks[10], (HEADS, N_PATCH, N_PATCH), jnp.float32) * std,
        "ln2_g": 1.0 + jax.random.normal(ks[11], (1, EMBED), jnp.float32) * std,
        "ln2_b": jax.random.normal(ks[12], (1, EMBED), jnp.float32) * std,
        "w1": jax.random.normal(ks[13], (EMBED, MLP_HIDDEN), jnp.float32) * std,
        "b1": jnp.zeros((1, MLP_HIDDEN), jnp.float32),
        "w2": jax.random.normal(ks[14], (MLP_HIDDEN, EMBED), jnp.float32) * std,
        "b2": jnp.zeros((1, EMBED), jnp.float32),
        "fln_g": jnp.ones((1, EMBED), jnp.float32),
        "fln_b": jnp.zeros((1, EMBED), jnp.float32),
        "cls_w": jax.random.normal(ks[15], (EMBED, NUM_CLASSES), jnp.float32) * std,
        "cls_b": jax.random.normal(ks[16], (1, NUM_CLASSES), jnp.float32) * std,
    }
    return p


# -------------------- one-time frozen-weight packing --------------------
def prepare_params(p):
    """Hoisted out of the per-call path: packs all frozen weights into two slabs."""
    # bf16 matmul-weight slab
    wslab = jnp.zeros((WSLAB_ROWS, LANES), jnp.float32)
    wslab = wslab.at[W_PATCH:W_PATCH + PATCH_DIM, :EMBED].set(p["patch_w"])
    wslab = wslab.at[W_QKV:W_QKV + EMBED, :3 * EMBED].set(p["wqkv"])
    wslab = wslab.at[W_PROJ:W_PROJ + EMBED, :EMBED].set(p["wproj"])
    wslab = wslab.at[W_MLP1:W_MLP1 + EMBED, :MLP_HIDDEN].set(p["w1"])
    wslab = wslab.at[W_MLP2:W_MLP2 + MLP_HIDDEN, :EMBED].set(p["w2"])
    wslab = wslab.at[W_CLS:W_CLS + EMBED, :NUM_CLASSES].set(p["cls_w"])
    wslab = wslab.astype(jnp.bfloat16)

    # f32 aux slab: biases / LN vectors / attention bias+mask / pool matrix
    aux = jnp.zeros((AUX_ROWS, LANES), jnp.float32)
    for row, vals in [
        (ROW_PATCH_B, p["patch_b"]), (ROW_EMB_G, p["emb_ln_g"]), (ROW_EMB_B, p["emb_ln_b"]),
        (ROW_LN1_G, p["ln1_g"]), (ROW_LN1_B, p["ln1_b"]), (ROW_BQKV, p["bqkv"]),
        (ROW_BPROJ, p["bproj"]), (ROW_LN2_G, p["ln2_g"]), (ROW_LN2_B, p["ln2_b"]),
        (ROW_B1, p["b1"]), (ROW_B2, p["b2"]), (ROW_FLN_G, p["fln_g"]),
        (ROW_FLN_B, p["fln_b"]), (ROW_CLS_B, p["cls_b"]),
    ]:
        v = vals.reshape(-1)
        aux = aux.at[row, :v.shape[0]].set(v)

    # per-head relative-position bias tiled over batches + block-diagonal batch mask
    tok_b = jnp.arange(BN) // N_PATCH
    cross = jnp.where(tok_b[:, None] != tok_b[None, :], NEG_INF, 0.0)
    for h in range(HEADS):
        bm = jnp.tile(p["relbias"][h], (B, B)) + cross       # [BN, BN]
        aux = aux.at[ROW_MASK + h * BN:ROW_MASK + (h + 1) * BN, :BN].set(bm)

    # mean-pool matrix: pooled[b] = mean over that batch's N_PATCH tokens
    pool = jnp.zeros((OUT_ROWS, BN), jnp.float32)
    for b in range(B):
        pool = pool.at[b, b * N_PATCH:(b + 1) * N_PATCH].set(1.0 / N_PATCH)
    aux = aux.at[ROW_POOL:ROW_POOL + OUT_ROWS, :BN].set(pool)

    return wslab, aux


# -------------------- forward (Pallas) --------------------
def swin_classifier_forward(x, wslab, aux):
    Bx = x.shape[0]
    # glue: NCHW -> [B*N, C*ph*pw] patch rows (matches Conv2d patch embedding)
    patches = x.reshape(Bx, C_IN, GRID, PATCH, GRID, PATCH)
    patches = patches.transpose(0, 2, 4, 1, 3, 5).reshape(Bx * N_PATCH, PATCH_DIM)
    patches = patches.astype(jnp.bfloat16)

    logits_pad = pl.pallas_call(
        swin_fused_kernel,
        out_shape=jax.ShapeDtypeStruct((OUT_ROWS, LANES), jnp.float32),
        in_specs=[
            pl.BlockSpec((BN, PATCH_DIM), lambda: (0, 0)),
            pl.BlockSpec((WSLAB_ROWS, LANES), lambda: (0, 0)),
            pl.BlockSpec((AUX_ROWS, LANES), lambda: (0, 0)),
        ],
        out_specs=pl.BlockSpec((OUT_ROWS, LANES), lambda: (0, 0)),
    )(patches, wslab, aux)

    return logits_pad[:Bx, :NUM_CLASSES]


# -------------------- pure-JAX reference (for sanity check) --------------
def reference_forward(x, p):
    Bx = x.shape[0]
    patches = x.reshape(Bx, C_IN, GRID, PATCH, GRID, PATCH)
    patches = patches.transpose(0, 2, 4, 1, 3, 5).reshape(Bx * N_PATCH, PATCH_DIM)
    emb = patches @ p["patch_w"] + p["patch_b"]
    emb = _layernorm(emb, p["emb_ln_g"], p["emb_ln_b"]).reshape(Bx, N_PATCH, EMBED)

    def block(xb):
        h = _layernorm(xb, p["ln1_g"], p["ln1_b"])
        qkv = h @ p["wqkv"] + p["bqkv"]
        q, k, v = qkv[:, :EMBED], qkv[:, EMBED:2 * EMBED], qkv[:, 2 * EMBED:]
        outs = []
        for hh in range(HEADS):
            qh = q[:, hh * HEAD_DIM:(hh + 1) * HEAD_DIM]
            kh = k[:, hh * HEAD_DIM:(hh + 1) * HEAD_DIM]
            vh = v[:, hh * HEAD_DIM:(hh + 1) * HEAD_DIM]
            s = qh @ kh.T / (HEAD_DIM ** 0.5) + p["relbias"][hh]
            outs.append(jax.nn.softmax(s, axis=-1) @ vh)
        attn = jnp.concatenate(outs, axis=-1) @ p["wproj"] + p["bproj"]
        xb = xb + attn
        h2 = _layernorm(xb, p["ln2_g"], p["ln2_b"])
        m = jax.nn.gelu(h2 @ p["w1"] + p["b1"], approximate=True) @ p["w2"] + p["b2"]
        return xb + m

    h = jax.vmap(block)(emb)
    h = _layernorm(h, p["fln_g"], p["fln_b"])
    pooled = jnp.mean(h, axis=1)
    return pooled @ p["cls_w"] + p["cls_b"]


if __name__ == "__main__":
    key = jax.random.PRNGKey(0)
    kx, kp = jax.random.split(key)
    x = jax.random.normal(kx, (B, C_IN, IMG, IMG), jnp.float32)   # NCHW input
    params = init_params(kp)

    # one-time packing of the frozen encoder + classifier weights
    wslab, aux = prepare_params(params)
    wslab, aux = jax.block_until_ready(wslab), jax.block_until_ready(aux)

    fwd = jax.jit(swin_classifier_forward)
    logits = jax.block_until_ready(fwd(x, wslab, aux))
    ref = jax.block_until_ready(reference_forward(x, params))

    assert logits.shape == (B, NUM_CLASSES)
    assert jnp.all(jnp.isfinite(logits))
    assert jnp.allclose(logits, ref, rtol=5e-2, atol=5e-2)
    print("KERNEL_OK")
</pallas_src>

<mosaic_0001>
module attributes {stable_mosaic.version = 11 : i64} {
  func.func @swin_fused_kernel(%arg0: memref<32x64xbf16, #tpu.memory_space<vmem>>, %arg1: memref<320x128xbf16, #tpu.memory_space<vmem>>, %arg2: memref<88x128xf32, #tpu.memory_space<vmem>>, %arg3: memref<8x128xf32, #tpu.memory_space<vmem>>) attributes {dimension_semantics = [], scalar_prefetch = 0 : i64, scratch_operands = 0 : i64, tpu.core_type = #tpu.core_type<tc>} {
    %c0 = arith.constant 0 : index
    %c0_0 = arith.constant 0 : index
    %0 = vector.load %arg1[%c0, %c0_0] : memref<320x128xbf16, #tpu.memory_space<vmem>>, vector<320x128xbf16>
    %c0_1 = arith.constant 0 : index
    %c0_2 = arith.constant 0 : index
    %1 = vector.load %arg2[%c0_1, %c0_2] : memref<88x128xf32, #tpu.memory_space<vmem>>, vector<88x128xf32>
    %2 = vector.extract_strided_slice %0 {offsets = [0, 0], sizes = [64, 32], strides = [1, 1]} : vector<320x128xbf16> to vector<64x32xbf16>
    %3 = vector.extract_strided_slice %0 {offsets = [64, 0], sizes = [32, 96], strides = [1, 1]} : vector<320x128xbf16> to vector<32x96xbf16>
    %4 = vector.extract_strided_slice %0 {offsets = [96, 0], sizes = [32, 32], strides = [1, 1]} : vector<320x128xbf16> to vector<32x32xbf16>
    %5 = vector.extract_strided_slice %0 {offsets = [128, 0], sizes = [32, 128], strides = [1, 1]} : vector<320x128xbf16> to vector<32x128xbf16>
    %6 = vector.extract_strided_slice %0 {offsets = [160, 0], sizes = [128, 32], strides = [1, 1]} : vector<320x128xbf16> to vector<128x32xbf16>
    %7 = vector.extract_strided_slice %0 {offsets = [288, 0], sizes = [32, 128], strides = [1, 1]} : vector<320x128xbf16> to vector<32x128xbf16>
    %c0_3 = arith.constant 0 : index
    %c0_4 = arith.constant 0 : index
    %8 = vector.load %arg0[%c0_3, %c0_4] : memref<32x64xbf16, #tpu.memory_space<vmem>>, vector<32x64xbf16>
    %cst = arith.constant dense<0.000000e+00> : vector<32x32xf32>
    %9 = tpu.matmul %8, %2, %cst {dimension_numbers = #tpu.dot_dimension_numbers<[1], [0], [0], [1], [0, 0, 1, 1], [], []>} : vector<32x64xbf16>, vector<64x32xbf16>, vector<32x32xf32> -> vector<32x32xf32>
    %10 = vector.extract_strided_slice %1 {offsets = [0, 0], sizes = [1, 32], strides = [1, 1]} : vector<88x128xf32> to vector<1x32xf32>
    %11 = vector.broadcast %10 : vector<1x32xf32> to vector<32x32xf32>
    %12 = arith.addf %9, %11 : vector<32x32xf32>
    %13 = vector.extract_strided_slice %1 {offsets = [1, 0], sizes = [1, 32], strides = [1, 1]} : vector<88x128xf32> to vector<1x32xf32>
    %14 = vector.extract_strided_slice %1 {offsets = [2, 0], sizes = [1, 32], strides = [1, 1]} : vector<88x128xf32> to vector<1x32xf32>
    %cst_5 = arith.constant dense<0.000000e+00> : vector<32xf32>
    %15 = vector.multi_reduction <add>, %12, %cst_5 [1] : vector<32x32xf32> to vector<32xf32>
    %16 = vector.shape_cast %15 : vector<32xf32> to vector<32x1xf32>
    %cst_6 = arith.constant 3.200000e+01 : f32
    %17 = vector.broadcast %cst_6 : f32 to vector<32x1xf32>
    %18 = arith.divf %16, %17 : vector<32x1xf32>
    %19 = vector.broadcast %18 : vector<32x1xf32> to vector<32x32xf32>
    %20 = arith.subf %12, %19 : vector<32x32xf32>
    %21 = arith.mulf %20, %20 : vector<32x32xf32>
    %cst_7 = arith.constant dense<0.000000e+00> : vector<32xf32>
    %22 = vector.multi_reduction <add>, %21, %cst_7 [1] : vector<32x32xf32> to vector<32xf32>
    %23 = vector.shape_cast %22 : vector<32xf32> to vector<32x1xf32>
    %cst_8 = arith.constant 3.200000e+01 : f32
    %24 = vector.broadcast %cst_8 : f32 to vector<32x1xf32>
    %25 = arith.divf %23, %24 : vector<32x1xf32>
    %26 = vector.broadcast %18 : vector<32x1xf32> to vector<32x32xf32>
    %27 = arith.subf %12, %26 : vector<32x32xf32>
    %cst_9 = arith.constant 9.99999974E-6 : f32
    %28 = vector.broadcast %cst_9 : f32 to vector<32x1xf32>
    %29 = arith.addf %25, %28 : vector<32x1xf32>
    %30 = math.rsqrt %29 : vector<32x1xf32>
    %31 = vector.broadcast %30 : vector<32x1xf32> to vector<32x32xf32>
    %32 = arith.mulf %27, %31 : vector<32x32xf32>
    %33 = vector.broadcast %13 : vector<1x32xf32> to vector<32x32xf32>
    %34 = arith.mulf %32, %33 : vector<32x32xf32>
    %35 = vector.broadcast %14 : vector<1x32xf32> to vector<32x32xf32>
    %36 = arith.addf %34, %35 : vector<32x32xf32>
    %37 = vector.extract_strided_slice %1 {offsets = [3, 0], sizes = [1, 32], strides = [1, 1]} : vector<88x128xf32> to vector<1x32xf32>
    %38 = vector.extract_strided_slice %1 {offsets = [4, 0], sizes = [1, 32], strides = [1, 1]} : vector<88x128xf32> to vector<1x32xf32>
    %cst_10 = arith.constant dense<0.000000e+00> : vector<32xf32>
    %39 = vector.multi_reduction <add>, %36, %cst_10 [1] : vector<32x32xf32> to vector<32xf32>
    %40 = vector.shape_cast %39 : vector<32xf32> to vector<32x1xf32>
    %cst_11 = arith.constant 3.200000e+01 : f32
    %41 = vector.broadcast %cst_11 : f32 to vector<32x1xf32>
    %42 = arith.divf %40, %41 : vector<32x1xf32>
    %43 = vector.broadcast %42 : vector<32x1xf32> to vector<32x32xf32>
    %44 = arith.subf %36, %43 : vector<32x32xf32>
    %45 = arith.mulf %44, %44 : vector<32x32xf32>
    %cst_12 = arith.constant dense<0.000000e+00> : vector<32xf32>
    %46 = vector.multi_reduction <add>, %45, %cst_12 [1] : vector<32x32xf32> to vector<32xf32>
    %47 = vector.shape_cast %46 : vector<32xf32> to vector<32x1xf32>
    %cst_13 = arith.constant 3.200000e+01 : f32
    %48 = vector.broadcast %cst_13 : f32 to vector<32x1xf32>
    %49 = arith.divf %47, %48 : vector<32x1xf32>
    %50 = vector.broadcast %42 : vector<32x1xf32> to vector<32x32xf32>
    %51 = arith.subf %36, %50 : vector<32x32xf32>
    %cst_14 = arith.constant 9.99999974E-6 : f32
    %52 = vector.broadcast %cst_14 : f32 to vector<32x1xf32>
    %53 = arith.addf %49, %52 : vector<32x1xf32>
    %54 = math.rsqrt %53 : vector<32x1xf32>
    %55 = vector.broadcast %54 : vector<32x1xf32> to vector<32x32xf32>
    %56 = arith.mulf %51, %55 : vector<32x32xf32>
    %57 = vector.broadcast %37 : vector<1x32xf32> to vector<32x32xf32>
    %58 = arith.mulf %56, %57 : vector<32x32xf32>
    %59 = vector.broadcast %38 : vector<1x32xf32> to vector<32x32xf32>
    %60 = arith.addf %58, %59 : vector<32x32xf32>
    %61 = arith.truncf %60 : vector<32x32xf32> to vector<32x32xbf16>
    %cst_15 = arith.constant dense<0.000000e+00> : vector<32x96xf32>
    %62 = tpu.matmul %61, %3, %cst_15 {dimension_numbers = #tpu.dot_dimension_numbers<[1], [0], [0], [1], [0, 0, 1, 1], [], []>} : vector<32x32xbf16>, vector<32x96xbf16>, vector<32x96xf32> -> vector<32x96xf32>
    %63 = vector.extract_strided_slice %1 {offsets = [5, 0], sizes = [1, 96], strides = [1, 1]} : vector<88x128xf32> to vector<1x96xf32>
    %64 = vector.broadcast %63 : vector<1x96xf32> to vector<32x96xf32>
    %65 = arith.addf %62, %64 : vector<32x96xf32>
    %cst_16 = arith.constant 0.000000e+00 : f32
    %66 = vector.broadcast %cst_16 : f32 to vector<32x32xf32>
    %67 = vector.extract_strided_slice %65 {offsets = [0, 0], sizes = [32, 16], strides = [1, 1]} : vector<32x96xf32> to vector<32x16xf32>
    %68 = vector.extract_strided_slice %65 {offsets = [0, 32], sizes = [32, 16], strides = [1, 1]} : vector<32x96xf32> to vector<32x16xf32>
    %69 = vector.extract_strided_slice %65 {offsets = [0, 64], sizes = [32, 16], strides = [1, 1]} : vector<32x96xf32> to vector<32x16xf32>
    %cst_17 = arith.constant dense<0.000000e+00> : vector<32x32xf32>
    %70 = tpu.matmul %67, %68, %cst_17 {dimension_numbers = #tpu.dot_dimension_numbers<[1], [1], [0], [0], [0, 0, 1, 0], [], []>} : vector<32x16xf32>, vector<32x16xf32>, vector<32x32xf32> -> vector<32x32xf32>
    %cst_18 = arith.constant 2.500000e-01 : f32
    %71 = vector.broadcast %cst_18 : f32 to vector<32x32xf32>
    %72 = arith.mulf %70, %71 : vector<32x32xf32>
    %73 = vector.extract_strided_slice %1 {offsets = [16, 0], sizes = [32, 32], strides = [1, 1]} : vector<88x128xf32> to vector<32x32xf32>
    %74 = arith.addf %72, %73 : vector<32x32xf32>
    %cst_19 = arith.constant dense<0xFF800000> : vector<32xf32>
    %75 = vector.multi_reduction <maximumf>, %74, %cst_19 [1] : vector<32x32xf32> to vector<32xf32>
    %76 = vector.shape_cast %75 : vector<32xf32> to vector<32x1xf32>
    %77 = vector.broadcast %76 : vector<32x1xf32> to vector<32x32xf32>
    %78 = arith.subf %74, %77 : vector<32x32xf32>
    %79 = math.exp %78 : vector<32x32xf32>
    %cst_20 = arith.constant dense<0.000000e+00> : vector<32xf32>
    %80 = vector.multi_reduction <add>, %79, %cst_20 [1] : vector<32x32xf32> to vector<32xf32>
    %81 = vector.shape_cast %80 : vector<32xf32> to vector<32x1xf32>
    %82 = tpu.reciprocal %81 {approx = true} : vector<32x1xf32> -> vector<32x1xf32>
    %83 = vector.broadcast %82 : vector<32x1xf32> to vector<32x32xf32>
    %84 = arith.mulf %79, %83 : vector<32x32xf32>
    %cst_21 = arith.constant dense<0.000000e+00> : vector<32x16xf32>
    %85 = tpu.matmul %84, %69, %cst_21 {dimension_numbers = #tpu.dot_dimension_numbers<[1], [0], [0], [1], [0, 0, 1, 1], [], []>} : vector<32x32xf32>, vector<32x16xf32>, vector<32x16xf32> -> vector<32x16xf32>
    %86 = arith.truncf %85 : vector<32x16xf32> to vector<32x16xbf16>
    %87 = vector.extract_strided_slice %4 {offsets = [0, 0], sizes = [16, 32], strides = [1, 1]} : vector<32x32xbf16> to vector<16x32xbf16>
    %cst_22 = arith.constant dense<0.000000e+00> : vector<32x32xf32>
    %88 = tpu.matmul %86, %87, %cst_22 {dimension_numbers = #tpu.dot_dimension_numbers<[1], [0], [0], [1], [0, 0, 1, 1], [], []>} : vector<32x16xbf16>, vector<16x32xbf16>, vector<32x32xf32> -> vector<32x32xf32>
    %89 = arith.addf %66, %88 : vector<32x32xf32>
    %90 = vector.extract_strided_slice %65 {offsets = [0, 16], sizes = [32, 16], strides = [1, 1]} : vector<32x96xf32> to vector<32x16xf32>
    %91 = vector.extract_strided_slice %65 {offsets = [0, 48], sizes = [32, 16], strides = [1, 1]} : vector<32x96xf32> to vector<32x16xf32>
    %92 = vector.extract_strided_slice %65 {offsets = [0, 80], sizes = [32, 16], strides = [1, 1]} : vector<32x96xf32> to vector<32x16xf32>
    %cst_23 = arith.constant dense<0.000000e+00> : vector<32x32xf32>
    %93 = tpu.matmul %90, %91, %cst_23 {dimension_numbers = #tpu.dot_dimension_numbers<[1], [1], [0], [0], [0, 0, 1, 0], [], []>} : vector<32x16xf32>, vector<32x16xf32>, vector<32x32xf32> -> vector<32x32xf32>
    %cst_24 = arith.constant 2.500000e-01 : f32
    %94 = vector.broadcast %cst_24 : f32 to vector<32x32xf32>
    %95 = arith.mulf %93, %94 : vector<32x32xf32>
    %96 = vector.extract_strided_slice %1 {offsets = [48, 0], sizes = [32, 32], strides = [1, 1]} : vector<88x128xf32> to vector<32x32xf32>
    %97 = arith.addf %95, %96 : vector<32x32xf32>
    %cst_25 = arith.constant dense<0xFF800000> : vector<32xf32>
    %98 = vector.multi_reduction <maximumf>, %97, %cst_25 [1] : vector<32x32xf32> to vector<32xf32>
    %99 = vector.shape_cast %98 : vector<32xf32> to vector<32x1xf32>
    %100 = vector.broadcast %99 : vector<32x1xf32> to vector<32x32xf32>
    %101 = arith.subf %97, %100 : vector<32x32xf32>
    %102 = math.exp %101 : vector<32x32xf32>
    %cst_26 = arith.constant dense<0.000000e+00> : vector<32xf32>
    %103 = vector.multi_reduction <add>, %102, %cst_26 [1] : vector<32x32xf32> to vector<32xf32>
    %104 = vector.shape_cast %103 : vector<32xf32> to vector<32x1xf32>
    %105 = tpu.reciprocal %104 {approx = true} : vector<32x1xf32> -> vector<32x1xf32>
    %106 = vector.broadcast %105 : vector<32x1xf32> to vector<32x32xf32>
    %107 = arith.mulf %102, %106 : vector<32x32xf32>
    %cst_27 = arith.constant dense<0.000000e+00> : vector<32x16xf32>
    %108 = tpu.matmul %107, %92, %cst_27 {dimension_numbers = #tpu.dot_dimension_numbers<[1], [0], [0], [1], [0, 0, 1, 1], [], []>} : vector<32x32xf32>, vector<32x16xf32>, vector<32x16xf32> -> vector<32x16xf32>
    %109 = arith.truncf %108 : vector<32x16xf32> to vector<32x16xbf16>
    %110 = vector.extract_strided_slice %4 {offsets = [16, 0], sizes = [16, 32], strides = [1, 1]} : vector<32x32xbf16> to vector<16x32xbf16>
    %cst_28 = arith.constant dense<0.000000e+00> : vector<32x32xf32>
    %111 = tpu.matmul %109, %110, %cst_28 {dimension_numbers = #tpu.dot_dimension_numbers<[1], [0], [0], [1], [0, 0, 1, 1], [], []>} : vector<32x16xbf16>, vector<16x32xbf16>, vector<32x32xf32> -> vector<32x32xf32>
    %112 = arith.addf %89, %111 : vector<32x32xf32>
    %113 = arith.addf %36, %112 : vector<32x32xf32>
    %114 = vector.extract_strided_slice %1 {offsets = [6, 0], sizes = [1, 32], strides = [1, 1]} : vector<88x128xf32> to vector<1x32xf32>
    %115 = vector.broadcast %114 : vector<1x32xf32> to vector<32x32xf32>
    %116 = arith.addf %113, %115 : vector<32x32xf32>
    %117 = vector.extract_strided_slice %1 {offsets = [7, 0], sizes = [1, 32], strides = [1, 1]} : vector<88x128xf32> to vector<1x32xf32>
    %118 = vector.extract_strided_slice %1 {offsets = [8, 0], sizes = [1, 32], strides = [1, 1]} : vector<88x128xf32> to vector<1x32xf32>
    %cst_29 = arith.constant dense<0.000000e+00> : vector<32xf32>
    %119 = vector.multi_reduction <add>, %116, %cst_29 [1] : vector<32x32xf32> to vector<32xf32>
    %120 = vector.shape_cast %119 : vector<32xf32> to vector<32x1xf32>
    %cst_30 = arith.constant 3.200000e+01 : f32
    %121 = vector.broadcast %cst_30 : f32 to vector<32x1xf32>
    %122 = arith.divf %120, %121 : vector<32x1xf32>
    %123 = vector.broadcast %122 : vector<32x1xf32> to vector<32x32xf32>
    %124 = arith.subf %116, %123 : vector<32x32xf32>
    %125 = arith.mulf %124, %124 : vector<32x32xf32>
    %cst_31 = arith.constant dense<0.000000e+00> : vector<32xf32>
    %126 = vector.multi_reduction <add>, %125, %cst_31 [1] : vector<32x32xf32> to vector<32xf32>
    %127 = vector.shape_cast %126 : vector<32xf32> to vector<32x1xf32>
    %cst_32 = arith.constant 3.200000e+01 : f32
    %128 = vector.broadcast %cst_32 : f32 to vector<32x1xf32>
    %129 = arith.divf %127, %128 : vector<32x1xf32>
    %130 = vector.broadcast %122 : vector<32x1xf32> to vector<32x32xf32>
    %131 = arith.subf %116, %130 : vector<32x32xf32>
    %cst_33 = arith.constant 9.99999974E-6 : f32
    %132 = vector.broadcast %cst_33 : f32 to vector<32x1xf32>
    %133 = arith.addf %129, %132 : vector<32x1xf32>
    %134 = math.rsqrt %133 : vector<32x1xf32>
    %135 = vector.broadcast %134 : vector<32x1xf32> to vector<32x32xf32>
    %136 = arith.mulf %131, %135 : vector<32x32xf32>
    %137 = vector.broadcast %117 : vector<1x32xf32> to vector<32x32xf32>
    %138 = arith.mulf %136, %137 : vector<32x32xf32>
    %139 = vector.broadcast %118 : vector<1x32xf32> to vector<32x32xf32>
    %140 = arith.addf %138, %139 : vector<32x32xf32>
    %141 = arith.truncf %140 : vector<32x32xf32> to vector<32x32xbf16>
    %cst_34 = arith.constant dense<0.000000e+00> : vector<32x128xf32>
    %142 = tpu.matmul %141, %5, %cst_34 {dimension_numbers = #tpu.dot_dimension_numbers<[1], [0], [0], [1], [0, 0, 1, 1], [], []>} : vector<32x32xbf16>, vector<32x128xbf16>, vector<32x128xf32> -> vector<32x128xf32>
    %143 = vector.extract_strided_slice %1 {offsets = [9, 0], sizes = [1, 128], strides = [1, 1]} : vector<88x128xf32> to vector<1x128xf32>
    %144 = vector.broadcast %143 : vector<1x128xf32> to vector<32x128xf32>
    %145 = arith.addf %142, %144 : vector<32x128xf32>
    %146 = arith.mulf %145, %145 : vector<32x128xf32>
    %147 = arith.mulf %145, %146 : vector<32x128xf32>
    %cst_35 = arith.constant 4.471500e-02 : f32
    %148 = vector.broadcast %cst_35 : f32 to vector<32x128xf32>
    %149 = arith.mulf %148, %147 : vector<32x128xf32>
    %150 = arith.addf %145, %149 : vector<32x128xf32>
    %cst_36 = arith.constant 0.797884583 : f32
    %151 = vector.broadcast %cst_36 : f32 to vector<32x128xf32>
    %152 = arith.mulf %151, %150 : vector<32x128xf32>
    %153 = math.tanh %152 : vector<32x128xf32>
    %cst_37 = arith.constant 1.000000e+00 : f32
    %154 = vector.broadcast %cst_37 : f32 to vector<32x128xf32>
    %155 = arith.addf %154, %153 : vector<32x128xf32>
    %cst_38 = arith.constant 5.000000e-01 : f32
    %156 = vector.broadcast %cst_38 : f32 to vector<32x128xf32>
    %157 = arith.mulf %156, %155 : vector<32x128xf32>
    %158 = arith.mulf %145, %157 : vector<32x128xf32>
    %159 = arith.truncf %158 : vector<32x128xf32> to vector<32x128xbf16>
    %cst_39 = arith.constant dense<0.000000e+00> : vector<32x32xf32>
    %160 = tpu.matmul %159, %6, %cst_39 {dimension_numbers = #tpu.dot_dimension_numbers<[1], [0], [0], [1], [0, 0, 1, 1], [], []>} : vector<32x128xbf16>, vector<128x32xbf16>, vector<32x32xf32> -> vector<32x32xf32>
    %161 = vector.extract_strided_slice %1 {offsets = [10, 0], sizes = [1, 32], strides = [1, 1]} : vector<88x128xf32> to vector<1x32xf32>
    %162 = vector.broadcast %161 : vector<1x32xf32> to vector<32x32xf32>
    %163 = arith.addf %160, %162 : vector<32x32xf32>
    %164 = arith.addf %116, %163 : vector<32x32xf32>
    %165 = vector.extract_strided_slice %1 {offsets = [11, 0], sizes = [1, 32], strides = [1, 1]} : vector<88x128xf32> to vector<1x32xf32>
    %166 = vector.extract_strided_slice %1 {offsets = [12, 0], sizes = [1, 32], strides = [1, 1]} : vector<88x128xf32> to vector<1x32xf32>
    %cst_40 = arith.constant dense<0.000000e+00> : vector<32xf32>
    %167 = vector.multi_reduction <add>, %164, %cst_40 [1] : vector<32x32xf32> to vector<32xf32>
    %168 = vector.shape_cast %167 : vector<32xf32> to vector<32x1xf32>
    %cst_41 = arith.constant 3.200000e+01 : f32
    %169 = vector.broadcast %cst_41 : f32 to vector<32x1xf32>
    %170 = arith.divf %168, %169 : vector<32x1xf32>
    %171 = vector.broadcast %170 : vector<32x1xf32> to vector<32x32xf32>
    %172 = arith.subf %164, %171 : vector<32x32xf32>
    %173 = arith.mulf %172, %172 : vector<32x32xf32>
    %cst_42 = arith.constant dense<0.000000e+00> : vector<32xf32>
    %174 = vector.multi_reduction <add>, %173, %cst_42 [1] : vector<32x32xf32> to vector<32xf32>
    %175 = vector.shape_cast %174 : vector<32xf32> to vector<32x1xf32>
    %cst_43 = arith.constant 3.200000e+01 : f32
    %176 = vector.broadcast %cst_43 : f32 to vector<32x1xf32>
    %177 = arith.divf %175, %176 : vector<32x1xf32>
    %178 = vector.broadcast %170 : vector<32x1xf32> to vector<32x32xf32>
    %179 = arith.subf %164, %178 : vector<32x32xf32>
    %cst_44 = arith.constant 9.99999974E-6 : f32
    %180 = vector.broadcast %cst_44 : f32 to vector<32x1xf32>
    %181 = arith.addf %177, %180 : vector<32x1xf32>
    %182 = math.rsqrt %181 : vector<32x1xf32>
    %183 = vector.broadcast %182 : vector<32x1xf32> to vector<32x32xf32>
    %184 = arith.mulf %179, %183 : vector<32x32xf32>
    %185 = vector.broadcast %165 : vector<1x32xf32> to vector<32x32xf32>
    %186 = arith.mulf %184, %185 : vector<32x32xf32>
    %187 = vector.broadcast %166 : vector<1x32xf32> to vector<32x32xf32>
    %188 = arith.addf %186, %187 : vector<32x32xf32>
    %189 = vector.extract_strided_slice %1 {offsets = [80, 0], sizes = [8, 32], strides = [1, 1]} : vector<88x128xf32> to vector<8x32xf32>
    %cst_45 = arith.constant dense<0.000000e+00> : vector<8x32xf32>
    %190 = tpu.matmul %189, %188, %cst_45 {dimension_numbers = #tpu.dot_dimension_numbers<[1], [0], [0], [1], [0, 0, 1, 1], [], []>} : vector<8x32xf32>, vector<32x32xf32>, vector<8x32xf32> -> vector<8x32xf32>
    %191 = arith.truncf %190 : vector<8x32xf32> to vector<8x32xbf16>
    %cst_46 = arith.constant dense<0.000000e+00> : vector<8x128xf32>
    %192 = tpu.matmul %191, %7, %cst_46 {dimension_numbers = #tpu.dot_dimension_numbers<[1], [0], [0], [1], [0, 0, 1, 1], [], []>} : vector<8x32xbf16>, vector<32x128xbf16>, vector<8x128xf32> -> vector<8x128xf32>
    %193 = vector.extract_strided_slice %1 {offsets = [13, 0], sizes = [1, 128], strides = [1, 1]} : vector<88x128xf32> to vector<1x128xf32>
    %194 = vector.broadcast %193 : vector<1x128xf32> to vector<8x128xf32>
    %195 = arith.addf %192, %194 : vector<8x128xf32>
    %c0_47 = arith.constant 0 : index
    %c0_48 = arith.constant 0 : index
    %196 = vector.load %arg3[%c0_47, %c0_48] : memref<8x128xf32, #tpu.memory_space<vmem>>, vector<8x128xf32>
    tpu.vector_store %arg3[%c0_47, %c0_48], %195 {strides = array<i32>} : memref<8x128xf32, #tpu.memory_space<vmem>>, vector<8x128xf32>,
    return
  }
}

</mosaic_0001>

<llo_original>
// kernel: swin_classifier_forward.1
$region0: #{swin_classifier_forward.1}
  #allocation0 [shape = 'u32[]', space=smem, size = 0x4, offset = 0x4, fixed_abs, tag = 'smem constant byte address 0x4 - core index']
  #allocation1 [shape = 'u32[144,128]{1,0:T(1,128)}', space=vmem, size = 0x12000, scoped, tag = 'internal scratch']
  %s0 = inlined_call_operand.vmem [shape: bf16[32,64], index: 0, kind: input, shape index: {}]
  %s1 = inlined_call_operand.vmem [shape: bf16[320,128], index: 1, kind: input, shape index: {}]
  %s2 = inlined_call_operand.vmem [shape: f32[88,128], index: 2, kind: input, shape index: {}]
  %s3 = inlined_call_operand.vmem [shape: f32[8,128], index: 3, kind: output, shape index: {}]
  %s4 = sld [smem:[#allocation0]]
  $region22: #{swin_classifier_forward.1} parent=0
    _
  %s6 = ssub.s32 1, %s4
  %s7 = scalar_select 0, %s6, %s4
  // Predicated region
  $region2: #{swin_classifier_forward.1} parent=0 // pred_check
    _
  $region3: #{swin_classifier_forward.1} parent=0 // pred_check_branch
    %9 = sbr.rel (0) target = $region5
  $region4: #{swin_classifier_forward.1} parent=0 // pred_region
    _
  $region5: #{swin_classifier_forward.1} parent=0 // pred_fallthru
    _
  // Predicated region
  $region6: #{swin_classifier_forward.1} parent=0 // pred_check
    _
  $region7: #{swin_classifier_forward.1} parent=0 // pred_check_branch
    %11 = sbr.rel (0) target = $region9
  $region8: #{swin_classifier_forward.1} parent=0 // pred_region
    _
  $region9: #{swin_classifier_forward.1} parent=0 // pred_fallthru
    _
  // Predicated region
  $region10: #{swin_classifier_forward.1} parent=0 // pred_check
    _
  $region11: #{swin_classifier_forward.1} parent=0 // pred_check_branch
    %13 = sbr.rel (0) target = $region13
  $region12: #{swin_classifier_forward.1} parent=0 // pred_region
    _
  $region13: #{swin_classifier_forward.1} parent=0 // pred_fallthru
    _
  %v15 = vld [vmem:[%s1] sm:$0xf]
  %v16 = vld [vmem:[%s1 + $0x4] sm:$0xf]
  %v17 = vld [vmem:[%s1 + $0x8] sm:$0xf]
  %v18 = vld [vmem:[%s1 + $0xc] sm:$0xf]
  %v19 = vld [vmem:[%s1 + $0x10] sm:$0xf]
  %v20 = vld [vmem:[%s1 + $0x14] sm:$0xf]
  %v21 = vld [vmem:[%s1 + $0x18] sm:$0xf]
  %v22 = vld [vmem:[%s1 + $0x1c] sm:$0xf]
  %v23 = vld [vmem:[%s1 + $0x20] sm:$0xf]
  %v24 = vld [vmem:[%s1 + $0x24] sm:$0xf]
  %v25 = vld [vmem:[%s1 + $0x28] sm:$0xf]
  %v26 = vld [vmem:[%s1 + $0x2c] sm:$0xf]
  %v27 = vld [vmem:[%s1 + $0x30] sm:$0xf]
  %v28 = vld [vmem:[%s1 + $0x34] sm:$0xf]
  %v29 = vld [vmem:[%s1 + $0x38] sm:$0xf]
  %v30 = vld [vmem:[%s1 + $0x3c] sm:$0xf]
  %v31 = vld [vmem:[%s1 + $0x40] sm:$0xf]
  %v32 = vld [vmem:[%s1 + $0x44] sm:$0xf]
  %v33 = vld [vmem:[%s1 + $0x48] sm:$0xf]
  %v34 = vld [vmem:[%s1 + $0x4c] sm:$0xf]
  %v35 = vld [vmem:[%s1 + $0x50] sm:$0xf]
  %v36 = vld [vmem:[%s1 + $0x54] sm:$0xf]
  %v37 = vld [vmem:[%s1 + $0x58] sm:$0xf]
  %v38 = vld [vmem:[%s1 + $0x5c] sm:$0xf]
  %v39 = vld [vmem:[%s1 + $0x60] sm:$0xf]
  %v40 = vld [vmem:[%s1 + $0x64] sm:$0xf]
  %v41 = vld [vmem:[%s1 + $0x68] sm:$0xf]
  %v42 = vld [vmem:[%s1 + $0x6c] sm:$0xf]
  %v43 = vld [vmem:[%s1 + $0x70] sm:$0xf]
  %v44 = vld [vmem:[%s1 + $0x74] sm:$0xf]
  %v45 = vld [vmem:[%s1 + $0x78] sm:$0xf]
  %v46 = vld [vmem:[%s1 + $0x7c] sm:$0xf]
  %v47 = vld [vmem:[%s1 + $0x80] sm:$0xf]
  %v48 = vld [vmem:[%s1 + $0x84] sm:$0xf]
  %v49 = vld [vmem:[%s1 + $0x88] sm:$0xf]
  %v50 = vld [vmem:[%s1 + $0x8c] sm:$0xf]
  %v51 = vld [vmem:[%s1 + $0x90] sm:$0xf]
  %v52 = vld [vmem:[%s1 + $0x94] sm:$0xf]
  %v53 = vld [vmem:[%s1 + $0x98] sm:$0xf]
  %v54 = vld [vmem:[%s1 + $0x9c] sm:$0xf]
  %v55 = vld [vmem:[%s2] sm:$0xff]
  %v56 = vld [vmem:[%s2 + $0x8] sm:$0xff]
  %v57 = vld [vmem:[%s2 + $0x10] sm:$0xff]
  %v58 = vld [vmem:[%s2 + $0x18] sm:$0xff]
  %v59 = vld [vmem:[%s2 + $0x20] sm:$0xff]
  %v60 = vld [vmem:[%s2 + $0x28] sm:$0xff]
  %v61 = vld [vmem:[%s2 + $0x30] sm:$0xff]
  %v62 = vld [vmem:[%s2 + $0x38] sm:$0xff]
  %v63 = vld [vmem:[%s2 + $0x40] sm:$0xff]
  %v64 = vld [vmem:[%s2 + $0x48] sm:$0xff]
  %v65 = vld [vmem:[%s2 + $0x50] sm:$0xff]
  %v66 = vld [vmem:[%s0] sm:$0xf]
  %v67 = vld [vmem:[%s0 + $0x4] sm:$0xf]
  %v68 = vld [vmem:[%s0 + $0x8] sm:$0xf]
  %v69 = vld [vmem:[%s0 + $0xc] sm:$0xf]
  %v70 = vlaneseq
  %v71 = vshrl.u32 %v70, 7
  %v72 = vsub.s32 0, %v71
  %v73 = vrot.slane %v55, %v72
  %v78 = vunpack.c.l.b16 %v66
  %v79 = vunpack.c.l.b16 %v67
  %v80 = vunpack.c.l.b16 %v68
  %v81 = vunpack.c.l.b16 %v69
  %v82 = vpack.c.b16 %v79, %v78
  %v83 = vpack.c.b16 %v81, %v80
  %v92 = vunpack.c.l.b16 %v15
  %v93 = vunpack.c.l.b16 %v16
  %v94 = vunpack.c.l.b16 %v17
  %v95 = vunpack.c.l.b16 %v18
  %v96 = vunpack.c.l.b16 %v19
  %v97 = vunpack.c.l.b16 %v20
  %v98 = vunpack.c.l.b16 %v21
  %v99 = vunpack.c.l.b16 %v22
  %v100 = vpack.c.b16 %v93, %v92
  %v101 = vpack.c.b16 %v95, %v94
  %v102 = vpack.c.b16 %v97, %v96
  %v103 = vpack.c.b16 %v99, %v98
  %vm108 = vcmask 523264
  %v110 = vsel %vm108, %v82, 0
  %v113 = vsel %vm108, %v83, 0
  %115 = vmatprep.subr.bf16.mxu0 0
  %116 = vmatpush1.bf16.msra.mxu0 %v100
  %117 = vmatprep.subr.bf16.mxu0 0
  %118 = vmatpush1.bf16.msra.mxu0 %v101
  %119 = vmatprep.subr.bf16.mxu0 0
  %120 = vmatpush1.bf16.msra.mxu0 %v102
  %121 = vmatprep.subr.bf16.mxu0 0
  %122 = vmatpush1.bf16.msra.mxu0 %v103
  %123 = vmatprep.subr.bf16.mxu0 0
  %124 = vmatpush1.bf16.msra.mxu0 0
  %125 = vmatprep.subr.bf16.mxu0 0
  %126 = vmatpush1.bf16.msra.mxu0 0
  %127 = vmatprep.subr.bf16.mxu0 0
  %128 = vmatpush1.bf16.msra.mxu0 0
  %129 = vmatprep.subr.bf16.mxu0 0
  %130 = vmatpush1.bf16.msra.mxu0 0
  %131 = vmatprep.subr.bf16.mxu0 0
  %132 = vmatpush1.bf16.msra.mxu0 0
  %133 = vmatprep.subr.bf16.mxu0 0
  %134 = vmatpush1.bf16.msra.mxu0 0
  %135 = vmatprep.subr.bf16.mxu0 0
  %136 = vmatpush1.bf16.msra.mxu0 0
  %137 = vmatprep.subr.bf16.mxu0 0
  %138 = vmatpush1.bf16.msra.mxu0 0
  %139 = vmatprep.subr.bf16.mxu0 0
  %140 = vmatpush1.bf16.msra.mxu0 0
  %141 = vmatprep.subr.bf16.mxu0 0
  %142 = vmatpush1.bf16.msra.mxu0 0
  %143 = vmatprep.subr.bf16.mxu0 0
  %144 = vmatpush1.bf16.msra.mxu0 0
  %145 = vmatprep.subr.bf16.mxu0 0
  %146 = vmatpush1.bf16.msra.mxu0 0
  %147 = vmatprep.mubr.bf16.mxu0 0
  %148 = vmatmul.mubr.bf16.gmra.mrb[0].mxu0 %v110
  %v149 = vpop.f32.mrb[0].mxu0
  %v150 = vadd.f32 %v73, %v149
  %v151 = vpop.f32.mrb[0].mxu0
  %v152 = vpop.f32.mrb[0].mxu0
  %v153 = vadd.f32 %v73, %v152
  %v154 = vpop.f32.mrb[0].mxu0
  %155 = vmatprep.mubr.bf16.mxu0 0
  %156 = vmatmul.mubr.bf16.gmra.mrb[0].mxu0 %v113
  %v157 = vpop.f32.mrb[0].mxu0
  %v158 = vadd.f32 %v73, %v157
  %v159 = vpop.f32.mrb[0].mxu0
  %v160 = vpop.f32.mrb[0].mxu0
  %v161 = vadd.f32 %v73, %v160
  %v162 = vpop.f32.mrb[0].mxu0
  %163 = vdwg.mxu0
  %vm164 = vcmask 261120
  %v165 = vsel %vm164, %v150, 0.0
  %166 = vadd.xlane.f32.xlu0 %v165
  %v167 = vpop.xlane.xlu0 %166
  %v168 = vsel %vm164, %v153, 0.0
  %169 = vadd.xlane.f32.xlu0 %v168
  %v170 = vpop.xlane.xlu0 %169
  %v171 = vsel %vm164, %v158, 0.0
  %172 = vadd.xlane.f32.xlu0 %v171
  %v173 = vpop.xlane.xlu0 %172
  %v174 = vsel %vm164, %v161, 0.0
  %175 = vadd.xlane.f32.xlu0 %v174
  %v176 = vpop.xlane.xlu0 %175
  %v177 = vrcp.pop 32.0
  %v178 = vmul.f32 %v167, %v177
  %v179 = vmul.f32 %v170, %v177
  %v180 = vmul.f32 %v173, %v177
  %v181 = vmul.f32 %v176, %v177
  %v182 = vsub.f32 %v150, %v178
  %v183 = vsub.f32 %v153, %v179
  %v184 = vsub.f32 %v158, %v180
  %v185 = vsub.f32 %v161, %v181
  %v186 = vmul.f32 %v182, %v182
  %v187 = vmul.f32 %v183, %v183
  %v188 = vmul.f32 %v184, %v184
  %v189 = vmul.f32 %v185, %v185
  %v190 = vsel %vm164, %v186, 0.0
  %191 = vadd.xlane.f32.xlu0 %v190
  %v192 = vpop.xlane.xlu0 %191
  %v193 = vsel %vm164, %v187, 0.0
  %194 = vadd.xlane.f32.xlu0 %v193
  %v195 = vpop.xlane.xlu0 %194
  %v196 = vsel %vm164, %v188, 0.0
  %197 = vadd.xlane.f32.xlu0 %v196
  %v198 = vpop.xlane.xlu0 %197
  %v199 = vsel %vm164, %v189, 0.0
  %200 = vadd.xlane.f32.xlu0 %v199
  %v201 = vpop.xlane.xlu0 %200
  %v202 = vmul.f32 %v192, %v177
  %v203 = vmul.f32 %v195, %v177
  %v204 = vmul.f32 %v198, %v177
  %v205 = vmul.f32 %v201, %v177
  %v206 = vadd.f32 %v202, 1e-05
  %v207 = vadd.f32 %v203, 1e-05
  %v208 = vadd.f32 %v204, 1e-05
  %v209 = vadd.f32 %v205, 1e-05
  %v210 = vrsqrt.pop %v206
  %v211 = vrsqrt.pop %v207
  %v212 = vrsqrt.pop %v208
  %v213 = vrsqrt.pop %v209
  %v214 = vmul.f32 %v182, %v210
  %v215 = vmul.f32 %v183, %v211
  %v216 = vmul.f32 %v184, %v212
  %v217 = vmul.f32 %v185, %v213
  %v218 = vlaneseq
  %v219 = vshrl.u32 %v218, 7
  %v220 = vsub.s32 1, %v219
  %v221 = vrot.slane %v55, %v220
  %v222 = vmul.f32 %v214, %v221
  %v223 = vmul.f32 %v215, %v221
  %v224 = vmul.f32 %v216, %v221
  %v225 = vmul.f32 %v217, %v221
  %v226 = vlaneseq
  %v227 = vshrl.u32 %v226, 7
  %v228 = vsub.s32 2, %v227
  %v229 = vrot.slane %v55, %v228
  %v230 = vadd.f32 %v222, %v229
  %v231 = vadd.f32 %v223, %v229
  %v232 = vadd.f32 %v224, %v229
  %v233 = vadd.f32 %v225, %v229
  %v234 = vsel %vm164, %v230, 0.0
  %235 = vadd.xlane.f32.xlu0 %v234
  %v236 = vpop.xlane.xlu0 %235
  %v237 = vsel %vm164, %v231, 0.0
  %238 = vadd.xlane.f32.xlu0 %v237
  %v239 = vpop.xlane.xlu0 %238
  %v240 = vsel %vm164, %v232, 0.0
  %241 = vadd.xlane.f32.xlu0 %v240
  %v242 = vpop.xlane.xlu0 %241
  %v243 = vsel %vm164, %v233, 0.0
  %244 = vadd.xlane.f32.xlu0 %v243
  %v245 = vpop.xlane.xlu0 %244
  %v246 = vmul.f32 %v236, %v177
  %v247 = vmul.f32 %v239, %v177
  %v248 = vmul.f32 %v242, %v177
  %v249 = vmul.f32 %v245, %v177
  %v250 = vsub.f32 %v230, %v246
  %v251 = vsub.f32 %v231, %v247
  %v252 = vsub.f32 %v232, %v248
  %v253 = vsub.f32 %v233, %v249
  %v254 = vmul.f32 %v250, %v250
  %v255 = vmul.f32 %v251, %v251
  %v256 = vmul.f32 %v252, %v252
  %v257 = vmul.f32 %v253, %v253
  %v258 = vsel %vm164, %v254, 0.0
  %259 = vadd.xlane.f32.xlu0 %v258
  %v260 = vpop.xlane.xlu0 %259
  %v261 = vsel %vm164, %v255, 0.0
  %262 = vadd.xlane.f32.xlu0 %v261
  %v263 = vpop.xlane.xlu0 %262
  %v264 = vsel %vm164, %v256, 0.0
  %265 = vadd.xlane.f32.xlu0 %v264
  %v266 = vpop.xlane.xlu0 %265
  %v267 = vsel %vm164, %v257, 0.0
  %268 = vadd.xlane.f32.xlu0 %v267
  %v269 = vpop.xlane.xlu0 %268
  %v270 = vmul.f32 %v260, %v177
  %v271 = vmul.f32 %v263, %v177
  %v272 = vmul.f32 %v266, %v177
  %v273 = vmul.f32 %v269, %v177
  %v274 = vadd.f32 %v270, 1e-05
  %v275 = vadd.f32 %v271, 1e-05
  %v276 = vadd.f32 %v272, 1e-05
  %v277 = vadd.f32 %v273, 1e-05
  %v278 = vrsqrt.pop %v274
  %v279 = vrsqrt.pop %v275
  %v280 = vrsqrt.pop %v276
  %v281 = vrsqrt.pop %v277
  %v282 = vmul.f32 %v250, %v278
  %v283 = vmul.f32 %v251, %v279
  %v284 = vmul.f32 %v252, %v280
  %v285 = vmul.f32 %v253, %v281
  %v286 = vlaneseq
  %v287 = vshrl.u32 %v286, 7
  %v288 = vsub.s32 3, %v287
  %v289 = vrot.slane %v55, %v288
  %v290 = vmul.f32 %v282, %v289
  %v291 = vmul.f32 %v283, %v289
  %v292 = vmul.f32 %v284, %v289
  %v293 = vmul.f32 %v285, %v289
  %v294 = vlaneseq
  %v295 = vshrl.u32 %v294, 7
  %v296 = vsub.s32 4, %v295
  %v297 = vrot.slane %v55, %v296
  %v298 = vadd.f32 %v290, %v297
  %v299 = vadd.f32 %v291, %v297
  %v300 = vadd.f32 %v292, %v297
  %v301 = vadd.f32 %v293, %v297
  %v302 = vpack.c.bf16 %v299, %v298
  %v303 = vpack.c.bf16 %v301, %v300
  %v304 = vlaneseq
  %v305 = vshrl.u32 %v304, 7
  %v306 = vsub.s32 5, %v305
  %v307 = vrot.slane %v55, %v306
  %v312 = vunpack.c.l.b16 %v23
  %v313 = vunpack.c.l.b16 %v24
  %v314 = vunpack.c.l.b16 %v25
  %v315 = vunpack.c.l.b16 %v26
  %v316 = vpack.c.b16 %v313, %v312
  %v317 = vpack.c.b16 %v315, %v314
  %v321 = vsel %vm164, %v302, 0
  %v324 = vsel %vm164, %v303, 0
  %326 = vmatprep.subr.bf16.mxu0 0
  %327 = vmatpush1.bf16.msra.mxu0 %v316
  %328 = vmatprep.subr.bf16.mxu0 0
  %329 = vmatpush1.bf16.msra.mxu0 %v317
  %330 = vmatprep.subr.bf16.mxu0 0
  %331 = vmatpush1.bf16.msra.mxu0 0
  %332 = vmatprep.subr.bf16.mxu0 0
  %333 = vmatpush1.bf16.msra.mxu0 0
  %334 = vmatprep.subr.bf16.mxu0 0
  %335 = vmatpush1.bf16.msra.mxu0 0
  %336 = vmatprep.subr.bf16.mxu0 0
  %337 = vmatpush1.bf16.msra.mxu0 0
  %338 = vmatprep.subr.bf16.mxu0 0
  %339 = vmatpush1.bf16.msra.mxu0 0
  %340 = vmatprep.subr.bf16.mxu0 0
  %341 = vmatpush1.bf16.msra.mxu0 0
  %342 = vmatprep.subr.bf16.mxu0 0
  %343 = vmatpush1.bf16.msra.mxu0 0
  %344 = vmatprep.subr.bf16.mxu0 0
  %345 = vmatpush1.bf16.msra.mxu0 0
  %346 = vmatprep.subr.bf16.mxu0 0
  %347 = vmatpush1.bf16.msra.mxu0 0
  %348 = vmatprep.subr.bf16.mxu0 0
  %349 = vmatpush1.bf16.msra.mxu0 0
  %350 = vmatprep.subr.bf16.mxu0 0
  %351 = vmatpush1.bf16.msra.mxu0 0
  %352 = vmatprep.subr.bf16.mxu0 0
  %353 = vmatpush1.bf16.msra.mxu0 0
  %354 = vmatprep.subr.bf16.mxu0 0
  %355 = vmatpush1.bf16.msra.mxu0 0
  %356 = vmatprep.subr.bf16.mxu0 0
  %357 = vmatpush1.bf16.msra.mxu0 0
  %358 = vmatprep.mubr.bf16.mxu0 0
  %359 = vmatmul.mubr.bf16.gmra.mrb[0].mxu0 %v321
  %v360 = vpop.f32.mrb[0].mxu0
  %v361 = vadd.f32 %v307, %v360
  %v362 = vpop.f32.mrb[0].mxu0
  %v363 = vpop.f32.mrb[0].mxu0
  %v364 = vadd.f32 %v307, %v363
  %v365 = vpop.f32.mrb[0].mxu0
  %366 = vmatprep.mubr.bf16.mxu0 0
  %367 = vmatmul.mubr.bf16.gmra.mrb[0].mxu0 %v324
  %v368 = vpop.f32.mrb[0].mxu0
  %v369 = vadd.f32 %v307, %v368
  %v370 = vpop.f32.mrb[0].mxu0
  %v371 = vpop.f32.mrb[0].mxu0
  %v372 = vadd.f32 %v307, %v371
  %v373 = vpop.f32.mrb[0].mxu0
  %374 = vdwg.mxu0
  %379 = vrot.lane.b32.xlu0 %v361, 96
  %v380 = vpop.permute.xlu0 %379
  %381 = vrot.lane.b32.xlu0 %v364, 96
  %v382 = vpop.permute.xlu0 %381
  %383 = vrot.lane.b32.xlu0 %v369, 96
  %v384 = vpop.permute.xlu0 %383
  %385 = vrot.lane.b32.xlu0 %v372, 96
  %v386 = vpop.permute.xlu0 %385
  %vm387 = vcmask 130048
  %v388 = vsel %vm387, %v361, 0
  %v390 = vsel %vm387, %v364, 0
  %v392 = vsel %vm387, %v369, 0
  %v394 = vsel %vm387, %v372, 0
  %v396 = vsel %vm387, %v380, 0
  %v398 = vsel %vm387, %v382, 0
  %v400 = vsel %vm387, %v384, 0
  %v402 = vsel %vm387, %v386, 0
  %404 = vmatprep.subr.mxu0 0.0
  %405 = vmatpush1.xpose.msra.mxu0 %v396
  %406 = vmatprep.subr.mxu0 0.0
  %407 = vmatpush1.xpose.msra.mxu0 %v398
  %408 = vmatprep.subr.mxu0 0.0
  %409 = vmatpush1.xpose.msra.mxu0 %v400
  %410 = vmatprep.subr.mxu0 0.0
  %411 = vmatpush1.xpose.msra.mxu0 %v402
  %412 = vmatprep.subr.mxu0 0.0
  %413 = vmatpush1.xpose.msra.mxu0 0.0
  %414 = vmatprep.subr.mxu0 0.0
  %415 = vmatpush1.xpose.msra.mxu0 0.0
  %416 = vmatprep.subr.mxu0 0.0
  %417 = vmatpush1.xpose.msra.mxu0 0.0
  %418 = vmatprep.subr.mxu0 0.0
  %419 = vmatpush1.xpose.msra.mxu0 0.0
  %420 = vmatprep.subr.mxu0 0.0
  %421 = vmatpush1.xpose.msra.mxu0 0.0
  %422 = vmatprep.subr.mxu0 0.0
  %423 = vmatpush1.xpose.msra.mxu0 0.0
  %424 = vmatprep.subr.mxu0 0.0
  %425 = vmatpush1.xpose.msra.mxu0 0.0
  %426 = vmatprep.subr.mxu0 0.0
  %427 = vmatpush1.xpose.msra.mxu0 0.0
  %428 = vmatprep.subr.mxu0 0.0
  %429 = vmatpush1.xpose.msra.mxu0 0.0
  %430 = vmatprep.subr.mxu0 0.0
  %431 = vmatpush1.xpose.msra.mxu0 0.0
  %432 = vmatprep.subr.mxu0 0.0
  %433 = vmatpush1.xpose.msra.mxu0 0.0
  %434 = vmatprep.subr.mxu0 0.0
  %435 = vmatpush1.xpose.msra.mxu0 0.0
  %436 = vmatprep.subr.mxu0 0.0
  %437 = vmatpush1.xpose.msra.mxu0 0.0
  %438 = vmatprep.subr.mxu0 0.0
  %439 = vmatpush1.xpose.msra.mxu0 0.0
  %440 = vmatprep.subr.mxu0 0.0
  %441 = vmatpush1.xpose.msra.mxu0 0.0
  %442 = vmatprep.subr.mxu0 0.0
  %443 = vmatpush1.xpose.msra.mxu0 0.0
  %444 = vmatprep.subr.mxu0 0.0
  %445 = vmatpush1.xpose.msra.mxu0 0.0
  %446 = vmatprep.subr.mxu0 0.0
  %447 = vmatpush1.xpose.msra.mxu0 0.0
  %448 = vmatprep.subr.mxu0 0.0
  %449 = vmatpush1.xpose.msra.mxu0 0.0
  %450 = vmatprep.subr.mxu0 0.0
  %451 = vmatpush1.xpose.msra.mxu0 0.0
  %452 = vmatprep.subr.mxu0 0.0
  %453 = vmatpush1.xpose.msra.mxu0 0.0
  %454 = vmatprep.subr.mxu0 0.0
  %455 = vmatpush1.xpose.msra.mxu0 0.0
  %456 = vmatprep.subr.mxu0 0.0
  %457 = vmatpush1.xpose.msra.mxu0 0.0
  %458 = vmatprep.subr.mxu0 0.0
  %459 = vmatpush1.xpose.msra.mxu0 0.0
  %460 = vmatprep.subr.mxu0 0.0
  %461 = vmatpush1.xpose.msra.mxu0 0.0
  %462 = vmatprep.subr.mxu0 0.0
  %463 = vmatpush1.xpose.msra.mxu0 0.0
  %464 = vmatprep.subr.mxu0 0.0
  %465 = vmatpush1.xpose.msra.mxu0 0.0
  %466 = vmatprep.subr.mxu0 0.0
  %467 = vmatpush1.xpose.msra.mxu0 0.0
  %468 = vmatprep.mubr.f32.mxu0 0.0
  %469 = vmatmul.mubr.f32.gmra.mrb[0].mxu0 %v388
  %v470 = vpop.f32.mrb[0].mxu0
  %v471 = vadd.f32 0.0, %v470
  %v472 = vpop.f32.mrb[0].mxu0
  %473 = vmatprep.mubr.f32.mxu0 0.0
  %474 = vmatmul.mubr.f32.gmra.mrb[0].mxu0 %v390
  %v475 = vpop.f32.mrb[0].mxu0
  %v476 = vadd.f32 0.0, %v475
  %v477 = vpop.f32.mrb[0].mxu0
  %478 = vmatprep.mubr.f32.mxu0 0.0
  %479 = vmatmul.mubr.f32.gmra.mrb[0].mxu0 %v392
  %v480 = vpop.f32.mrb[0].mxu0
  %v481 = vadd.f32 0.0, %v480
  %v482 = vpop.f32.mrb[0].mxu0
  %483 = vmatprep.mubr.f32.mxu0 0.0
  %484 = vmatmul.mubr.f32.gmra.mrb[0].mxu0 %v394
  %v485 = vpop.f32.mrb[0].mxu0
  %v486 = vadd.f32 0.0, %v485
  %v487 = vpop.f32.mrb[0].mxu0
  %488 = vdwg.mxu0
  %v489 = vmul.f32 %v471, 0.25
  %v490 = vmul.f32 %v476, 0.25
  %v491 = vmul.f32 %v481, 0.25
  %v492 = vmul.f32 %v486, 0.25
  %v493 = vadd.f32 %v489, %v57
  %v494 = vadd.f32 %v490, %v58
  %v495 = vadd.f32 %v491, %v59
  %v496 = vadd.f32 %v492, %v60
  %v497 = vsel %vm164, %v493, -inf
  %498 = vmax.xlane.f32.xlu0 %v497
  %v499 = vpop.xlane.xlu0 %498
  %v500 = vsel %vm164, %v494, -inf
  %501 = vmax.xlane.f32.xlu0 %v500
  %v502 = vpop.xlane.xlu0 %501
  %v503 = vsel %vm164, %v495, -inf
  %504 = vmax.xlane.f32.xlu0 %v503
  %v505 = vpop.xlane.xlu0 %504
  %v506 = vsel %vm164, %v496, -inf
  %507 = vmax.xlane.f32.xlu0 %v506
  %v508 = vpop.xlane.xlu0 %507
  %v509 = vsub.f32 %v493, %v499
  %v510 = vsub.f32 %v494, %v502
  %v511 = vsub.f32 %v495, %v505
  %v512 = vsub.f32 %v496, %v508
  %v513 = vmul.f32 %v509, 1.442695
  %v514 = vpow.pop %v513
  %v515 = vmul.f32 %v510, 1.442695
  %v516 = vpow.pop %v515
  %v517 = vmul.f32 %v511, 1.442695
  %v518 = vpow.pop %v517
  %v519 = vmul.f32 %v512, 1.442695
  %v520 = vpow.pop %v519
  %v521 = vsel %vm164, %v514, 0.0
  %522 = vadd.xlane.f32.xlu0 %v521
  %v523 = vpop.xlane.xlu0 %522
  %v524 = vsel %vm164, %v516, 0.0
  %525 = vadd.xlane.f32.xlu0 %v524
  %v526 = vpop.xlane.xlu0 %525
  %v527 = vsel %vm164, %v518, 0.0
  %528 = vadd.xlane.f32.xlu0 %v527
  %v529 = vpop.xlane.xlu0 %528
  %v530 = vsel %vm164, %v520, 0.0
  %531 = vadd.xlane.f32.xlu0 %v530
  %v532 = vpop.xlane.xlu0 %531
  %v533 = vrcp.pop %v523
  %v534 = vrcp.pop %v526
  %v535 = vrcp.pop %v529
  %v536 = vrcp.pop %v532
  %v537 = vmul.f32 %v514, %v533
  %v538 = vmul.f32 %v516, %v534
  %v539 = vmul.f32 %v518, %v535
  %v540 = vmul.f32 %v520, %v536
  %541 = vrot.lane.b32.xlu0 %v361, 64
  %v542 = vpop.permute.xlu0 %541
  %543 = vrot.lane.b32.xlu0 %v364, 64
  %v544 = vpop.permute.xlu0 %543
  %545 = vrot.lane.b32.xlu0 %v369, 64
  %v546 = vpop.permute.xlu0 %545
  %547 = vrot.lane.b32.xlu0 %v372, 64
  %v548 = vpop.permute.xlu0 %547
  %v554 = vsel %vm164, %v537, 0
  %v557 = vsel %vm164, %v538, 0
  %v560 = vsel %vm164, %v539, 0
  %v563 = vsel %vm164, %v540, 0
  %565 = vmatprep.subr.mxu0 0.0
  %566 = vmatpush1.msra.mxu0 %v542
  %567 = vmatprep.subr.mxu0 0.0
  %568 = vmatpush1.msra.mxu0 %v544
  %569 = vmatprep.subr.mxu0 0.0
  %570 = vmatpush1.msra.mxu0 %v546
  %571 = vmatprep.subr.mxu0 0.0
  %572 = vmatpush1.msra.mxu0 %v548
  %573 = vmatprep.subr.mxu0 0.0
  %574 = vmatpush1.msra.mxu0 0.0
  %575 = vmatprep.subr.mxu0 0.0
  %576 = vmatpush1.msra.mxu0 0.0
  %577 = vmatprep.subr.mxu0 0.0
  %578 = vmatpush1.msra.mxu0 0.0
  %579 = vmatprep.subr.mxu0 0.0
  %580 = vmatpush1.msra.mxu0 0.0
  %581 = vmatprep.subr.mxu0 0.0
  %582 = vmatpush1.msra.mxu0 0.0
  %583 = vmatprep.subr.mxu0 0.0
  %584 = vmatpush1.msra.mxu0 0.0
  %585 = vmatprep.subr.mxu0 0.0
  %586 = vmatpush1.msra.mxu0 0.0
  %587 = vmatprep.subr.mxu0 0.0
  %588 = vmatpush1.msra.mxu0 0.0
  %589 = vmatprep.subr.mxu0 0.0
  %590 = vmatpush1.msra.mxu0 0.0
  %591 = vmatprep.subr.mxu0 0.0
  %592 = vmatpush1.msra.mxu0 0.0
  %593 = vmatprep.subr.mxu0 0.0
  %594 = vmatpush1.msra.mxu0 0.0
  %595 = vmatprep.subr.mxu0 0.0
  %596 = vmatpush1.msra.mxu0 0.0
  %597 = vmatprep.subr.mxu0 0.0
  %598 = vmatpush1.msra.mxu0 0.0
  %599 = vmatprep.subr.mxu0 0.0
  %600 = vmatpush1.msra.mxu0 0.0
  %601 = vmatprep.subr.mxu0 0.0
  %602 = vmatpush1.msra.mxu0 0.0
  %603 = vmatprep.subr.mxu0 0.0
  %604 = vmatpush1.msra.mxu0 0.0
  %605 = vmatprep.subr.mxu0 0.0
  %606 = vmatpush1.msra.mxu0 0.0
  %607 = vmatprep.subr.mxu0 0.0
  %608 = vmatpush1.msra.mxu0 0.0
  %609 = vmatprep.subr.mxu0 0.0
  %610 = vmatpush1.msra.mxu0 0.0
  %611 = vmatprep.subr.mxu0 0.0
  %612 = vmatpush1.msra.mxu0 0.0
  %613 = vmatprep.subr.mxu0 0.0
  %614 = vmatpush1.msra.mxu0 0.0
  %615 = vmatprep.subr.mxu0 0.0
  %616 = vmatpush1.msra.mxu0 0.0
  %617 = vmatprep.subr.mxu0 0.0
  %618 = vmatpush1.msra.mxu0 0.0
  %619 = vmatprep.subr.mxu0 0.0
  %620 = vmatpush1.msra.mxu0 0.0
  %621 = vmatprep.subr.mxu0 0.0
  %622 = vmatpush1.msra.mxu0 0.0
  %623 = vmatprep.subr.mxu0 0.0
  %624 = vmatpush1.msra.mxu0 0.0
  %625 = vmatprep.subr.mxu0 0.0
  %626 = vmatpush1.msra.mxu0 0.0
  %627 = vmatprep.subr.mxu0 0.0
  %628 = vmatpush1.msra.mxu0 0.0
  %629 = vmatprep.mubr.f32.mxu0 0.0
  %630 = vmatmul.mubr.f32.gmra.mrb[0].mxu0 %v554
  %v631 = vpop.f32.mrb[0].mxu0
  %v632 = vadd.f32 0.0, %v631
  %v633 = vpop.f32.mrb[0].mxu0
  %634 = vmatprep.mubr.f32.mxu0 0.0
  %635 = vmatmul.mubr.f32.gmra.mrb[0].mxu0 %v557
  %v636 = vpop.f32.mrb[0].mxu0
  %v637 = vadd.f32 0.0, %v636
  %v638 = vpop.f32.mrb[0].mxu0
  %639 = vmatprep.mubr.f32.mxu0 0.0
  %640 = vmatmul.mubr.f32.gmra.mrb[0].mxu0 %v560
  %v641 = vpop.f32.mrb[0].mxu0
  %v642 = vadd.f32 0.0, %v641
  %v643 = vpop.f32.mrb[0].mxu0
  %644 = vmatprep.mubr.f32.mxu0 0.0
  %645 = vmatmul.mubr.f32.gmra.mrb[0].mxu0 %v563
  %v646 = vpop.f32.mrb[0].mxu0
  %v647 = vadd.f32 0.0, %v646
  %v648 = vpop.f32.mrb[0].mxu0
  %649 = vdwg.mxu0
  %v650 = vpack.c.bf16 %v637, %v632
  %v651 = vpack.c.bf16 %v647, %v642
  %652 = vrot.lane.b32.xlu0 %v361, 112
  %v653 = vpop.permute.xlu0 %652
  %654 = vrot.lane.b32.xlu0 %v364, 112
  %v655 = vpop.permute.xlu0 %654
  %656 = vrot.lane.b32.xlu0 %v369, 112
  %v657 = vpop.permute.xlu0 %656
  %658 = vrot.lane.b32.xlu0 %v372, 112
  %v659 = vpop.permute.xlu0 %658
  %660 = vrot.lane.b32.xlu0 %v361, 80
  %v661 = vpop.permute.xlu0 %660
  %662 = vrot.lane.b32.xlu0 %v364, 80
  %v663 = vpop.permute.xlu0 %662
  %664 = vrot.lane.b32.xlu0 %v369, 80
  %v665 = vpop.permute.xlu0 %664
  %666 = vrot.lane.b32.xlu0 %v372, 80
  %v667 = vpop.permute.xlu0 %666
  %v668 = vsel %vm387, %v653, 0
  %v670 = vsel %vm387, %v655, 0
  %v672 = vsel %vm387, %v657, 0
  %v674 = vsel %vm387, %v659, 0
  %v676 = vsel %vm387, %v661, 0
  %v678 = vsel %vm387, %v663, 0
  %v680 = vsel %vm387, %v665, 0
  %v682 = vsel %vm387, %v667, 0
  %684 = vmatprep.subr.mxu0 0.0
  %685 = vmatpush1.xpose.msra.mxu0 %v676
  %686 = vmatprep.subr.mxu0 0.0
  %687 = vmatpush1.xpose.msra.mxu0 %v678
  %688 = vmatprep.subr.mxu0 0.0
  %689 = vmatpush1.xpose.msra.mxu0 %v680
  %690 = vmatprep.subr.mxu0 0.0
  %691 = vmatpush1.xpose.msra.mxu0 %v682
  %692 = vmatprep.subr.mxu0 0.0
  %693 = vmatpush1.xpose.msra.mxu0 0.0
  %694 = vmatprep.subr.mxu0 0.0
  %695 = vmatpush1.xpose.msra.mxu0 0.0
  %696 = vmatprep.subr.mxu0 0.0
  %697 = vmatpush1.xpose.msra.mxu0 0.0
  %698 = vmatprep.subr.mxu0 0.0
  %699 = vmatpush1.xpose.msra.mxu0 0.0
  %700 = vmatprep.subr.mxu0 0.0
  %701 = vmatpush1.xpose.msra.mxu0 0.0
  %702 = vmatprep.subr.mxu0 0.0
  %703 = vmatpush1.xpose.msra.mxu0 0.0
  %704 = vmatprep.subr.mxu0 0.0
  %705 = vmatpush1.xpose.msra.mxu0 0.0
  %706 = vmatprep.subr.mxu0 0.0
  %707 = vmatpush1.xpose.msra.mxu0 0.0
  %708 = vmatprep.subr.mxu0 0.0
  %709 = vmatpush1.xpose.msra.mxu0 0.0
  %710 = vmatprep.subr.mxu0 0.0
  %711 = vmatpush1.xpose.msra.mxu0 0.0
  %712 = vmatprep.subr.mxu0 0.0
  %713 = vmatpush1.xpose.msra.mxu0 0.0
  %714 = vmatprep.subr.mxu0 0.0
  %715 = vmatpush1.xpose.msra.mxu0 0.0
  %716 = vmatprep.subr.mxu0 0.0
  %717 = vmatpush1.xpose.msra.mxu0 0.0
  %718 = vmatprep.subr.mxu0 0.0
  %719 = vmatpush1.xpose.msra.mxu0 0.0
  %720 = vmatprep.subr.mxu0 0.0
  %721 = vmatpush1.xpose.msra.mxu0 0.0
  %722 = vmatprep.subr.mxu0 0.0
  %723 = vmatpush1.xpose.msra.mxu0 0.0
  %724 = vmatprep.subr.mxu0 0.0
  %725 = vmatpush1.xpose.msra.mxu0 0.0
  %726 = vmatprep.subr.mxu0 0.0
  %727 = vmatpush1.xpose.msra.mxu0 0.0
  %728 = vmatprep.subr.mxu0 0.0
  %729 = vmatpush1.xpose.msra.mxu0 0.0
  %730 = vmatprep.subr.mxu0 0.0
  %731 = vmatpush1.xpose.msra.mxu0 0.0
  %732 = vmatprep.subr.mxu0 0.0
  %733 = vmatpush1.xpose.msra.mxu0 0.0
  %734 = vmatprep.subr.mxu0 0.0
  %735 = vmatpush1.xpose.msra.mxu0 0.0
  %736 = vmatprep.subr.mxu0 0.0
  %737 = vmatpush1.xpose.msra.mxu0 0.0
  %738 = vmatprep.subr.mxu0 0.0
  %739 = vmatpush1.xpose.msra.mxu0 0.0
  %740 = vmatprep.subr.mxu0 0.0
  %741 = vmatpush1.xpose.msra.mxu0 0.0
  %742 = vmatprep.subr.mxu0 0.0
  %743 = vmatpush1.xpose.msra.mxu0 0.0
  %744 = vmatprep.subr.mxu0 0.0
  %745 = vmatpush1.xpose.msra.mxu0 0.0
  %746 = vmatprep.subr.mxu0 0.0
  %747 = vmatpush1.xpose.msra.mxu0 0.0
  %748 = vmatprep.mubr.f32.mxu0 0.0
  %749 = vmatmul.mubr.f32.gmra.mrb[0].mxu0 %v668
  %v750 = vpop.f32.mrb[0].mxu0
  %v751 = vadd.f32 0.0, %v750
  %v752 = vpop.f32.mrb[0].mxu0
  %753 = vmatprep.mubr.f32.mxu0 0.0
  %754 = vmatmul.mubr.f32.gmra.mrb[0].mxu0 %v670
  %v755 = vpop.f32.mrb[0].mxu0
  %v756 = vadd.f32 0.0, %v755
  %v757 = vpop.f32.mrb[0].mxu0
  %758 = vmatprep.mubr.f32.mxu0 0.0
  %759 = vmatmul.mubr.f32.gmra.mrb[0].mxu0 %v672
  %v760 = vpop.f32.mrb[0].mxu0
  %v761 = vadd.f32 0.0, %v760
  %v762 = vpop.f32.mrb[0].mxu0
  %763 = vmatprep.mubr.f32.mxu0 0.0
  %764 = vmatmul.mubr.f32.gmra.mrb[0].mxu0 %v674
  %v765 = vpop.f32.mrb[0].mxu0
  %v766 = vadd.f32 0.0, %v765
  %v767 = vpop.f32.mrb[0].mxu0
  %768 = vdwg.mxu0
  %v769 = vmul.f32 %v751, 0.25
  %v770 = vmul.f32 %v756, 0.25
  %v771 = vmul.f32 %v761, 0.25
  %v772 = vmul.f32 %v766, 0.25
  %v773 = vadd.f32 %v769, %v61
  %v774 = vadd.f32 %v770, %v62
  %v775 = vadd.f32 %v771, %v63
  %v776 = vadd.f32 %v772, %v64
  %v777 = vsel %vm164, %v773, -inf
  %778 = vmax.xlane.f32.xlu0 %v777
  %v779 = vpop.xlane.xlu0 %778
  %v780 = vsel %vm164, %v774, -inf
  %781 = vmax.xlane.f32.xlu0 %v780
  %v782 = vpop.xlane.xlu0 %781
  %v783 = vsel %vm164, %v775, -inf
  %784 = vmax.xlane.f32.xlu0 %v783
  %v785 = vpop.xlane.xlu0 %784
  %v786 = vsel %vm164, %v776, -inf
  %787 = vmax.xlane.f32.xlu0 %v786
  %v788 = vpop.xlane.xlu0 %787
  %v789 = vsub.f32 %v773, %v779
  %v790 = vsub.f32 %v774, %v782
  %v791 = vsub.f32 %v775, %v785
  %v792 = vsub.f32 %v776, %v788
  %v793 = vmul.f32 %v789, 1.442695
  %v794 = vpow.pop %v793
  %v795 = vmul.f32 %v790, 1.442695
  %v796 = vpow.pop %v795
  %v797 = vmul.f32 %v791, 1.442695
  %v798 = vpow.pop %v797
  %v799 = vmul.f32 %v792, 1.442695
  %v800 = vpow.pop %v799
  %v801 = vsel %vm164, %v794, 0.0
  %802 = vadd.xlane.f32.xlu0 %v801
  %v803 = vpop.xlane.xlu0 %802
  %v804 = vsel %vm164, %v796, 0.0
  %805 = vadd.xlane.f32.xlu0 %v804
  %v806 = vpop.xlane.xlu0 %805
  %v807 = vsel %vm164, %v798, 0.0
  %808 = vadd.xlane.f32.xlu0 %v807
  %v809 = vpop.xlane.xlu0 %808
  %v810 = vsel %vm164, %v800, 0.0
  %811 = vadd.xlane.f32.xlu0 %v810
  %v812 = vpop.xlane.xlu0 %811
  %v813 = vrcp.pop %v803
  %v814 = vrcp.pop %v806
  %v815 = vrcp.pop %v809
  %v816 = vrcp.pop %v812
  %v817 = vmul.f32 %v794, %v813
  %v818 = vmul.f32 %v796, %v814
  %v819 = vmul.f32 %v798, %v815
  %v820 = vmul.f32 %v800, %v816
  %821 = vrot.lane.b32.xlu0 %v361, 48
  %v822 = vpop.permute.xlu0 %821
  %823 = vrot.lane.b32.xlu0 %v364, 48
  %v824 = vpop.permute.xlu0 %823
  %825 = vrot.lane.b32.xlu0 %v369, 48
  %v826 = vpop.permute.xlu0 %825
  %827 = vrot.lane.b32.xlu0 %v372, 48
  %v828 = vpop.permute.xlu0 %827
  %v834 = vsel %vm164, %v817, 0
  %v837 = vsel %vm164, %v818, 0
  %v840 = vsel %vm164, %v819, 0
  %v843 = vsel %vm164, %v820, 0
  %845 = vmatprep.subr.mxu0 0.0
  %846 = vmatpush1.msra.mxu0 %v822
  %847 = vmatprep.subr.mxu0 0.0
  %848 = vmatpush1.msra.mxu0 %v824
  %849 = vmatprep.subr.mxu0 0.0
  %850 = vmatpush1.msra.mxu0 %v826
  %851 = vmatprep.subr.mxu0 0.0
  %852 = vmatpush1.msra.mxu0 %v828
  %853 = vmatprep.subr.mxu0 0.0
  %854 = vmatpush1.msra.mxu0 0.0
  %855 = vmatprep.subr.mxu0 0.0
  %856 = vmatpush1.msra.mxu0 0.0
  %857 = vmatprep.subr.mxu0 0.0
  %858 = vmatpush1.msra.mxu0 0.0
  %859 = vmatprep.subr.mxu0 0.0
  %860 = vmatpush1.msra.mxu0 0.0
  %861 = vmatprep.subr.mxu0 0.0
  %862 = vmatpush1.msra.mxu0 0.0
  %863 = vmatprep.subr.mxu0 0.0
  %864 = vmatpush1.msra.mxu0 0.0
  %865 = vmatprep.subr.mxu0 0.0
  %866 = vmatpush1.msra.mxu0 0.0
  %867 = vmatprep.subr.mxu0 0.0
  %868 = vmatpush1.msra.mxu0 0.0
  %869 = vmatprep.subr.mxu0 0.0
  %870 = vmatpush1.msra.mxu0 0.0
  %871 = vmatprep.subr.mxu0 0.0
  %872 = vmatpush1.msra.mxu0 0.0
  %873 = vmatprep.subr.mxu0 0.0
  %874 = vmatpush1.msra.mxu0 0.0
  %875 = vmatprep.subr.mxu0 0.0
  %876 = vmatpush1.msra.mxu0 0.0
  %877 = vmatprep.subr.mxu0 0.0
  %878 = vmatpush1.msra.mxu0 0.0
  %879 = vmatprep.subr.mxu0 0.0
  %880 = vmatpush1.msra.mxu0 0.0
  %881 = vmatprep.subr.mxu0 0.0
  %882 = vmatpush1.msra.mxu0 0.0
  %883 = vmatprep.subr.mxu0 0.0
  %884 = vmatpush1.msra.mxu0 0.0
  %885 = vmatprep.subr.mxu0 0.0
  %886 = vmatpush1.msra.mxu0 0.0
  %887 = vmatprep.subr.mxu0 0.0
  %888 = vmatpush1.msra.mxu0 0.0
  %889 = vmatprep.subr.mxu0 0.0
  %890 = vmatpush1.msra.mxu0 0.0
  %891 = vmatprep.subr.mxu0 0.0
  %892 = vmatpush1.msra.mxu0 0.0
  %893 = vmatprep.subr.mxu0 0.0
  %894 = vmatpush1.msra.mxu0 0.0
  %895 = vmatprep.subr.mxu0 0.0
  %896 = vmatpush1.msra.mxu0 0.0
  %897 = vmatprep.subr.mxu0 0.0
  %898 = vmatpush1.msra.mxu0 0.0
  %899 = vmatprep.subr.mxu0 0.0
  %900 = vmatpush1.msra.mxu0 0.0
  %901 = vmatprep.subr.mxu0 0.0
  %902 = vmatpush1.msra.mxu0 0.0
  %903 = vmatprep.subr.mxu0 0.0
  %904 = vmatpush1.msra.mxu0 0.0
  %905 = vmatprep.subr.mxu0 0.0
  %906 = vmatpush1.msra.mxu0 0.0
  %907 = vmatprep.subr.mxu0 0.0
  %908 = vmatpush1.msra.mxu0 0.0
  %909 = vmatprep.mubr.f32.mxu0 0.0
  %910 = vmatmul.mubr.f32.gmra.mrb[0].mxu0 %v834
  %v911 = vpop.f32.mrb[0].mxu0
  %v912 = vadd.f32 0.0, %v911
  %v913 = vpop.f32.mrb[0].mxu0
  %914 = vmatprep.mubr.f32.mxu0 0.0
  %915 = vmatmul.mubr.f32.gmra.mrb[0].mxu0 %v837
  %v916 = vpop.f32.mrb[0].mxu0
  %v917 = vadd.f32 0.0, %v916
  %v918 = vpop.f32.mrb[0].mxu0
  %919 = vmatprep.mubr.f32.mxu0 0.0
  %920 = vmatmul.mubr.f32.gmra.mrb[0].mxu0 %v840
  %v921 = vpop.f32.mrb[0].mxu0
  %v922 = vadd.f32 0.0, %v921
  %v923 = vpop.f32.mrb[0].mxu0
  %924 = vmatprep.mubr.f32.mxu0 0.0
  %925 = vmatmul.mubr.f32.gmra.mrb[0].mxu0 %v843
  %v926 = vpop.f32.mrb[0].mxu0
  %v927 = vadd.f32 0.0, %v926
  %v928 = vpop.f32.mrb[0].mxu0
  %929 = vdwg.mxu0
  %v930 = vpack.c.bf16 %v917, %v912
  %v931 = vpack.c.bf16 %v927, %v922
  %v934 = vunpack.c.l.b16 %v29
  %v935 = vunpack.c.l.b16 %v30
  %v936 = vpack.c.b16 %v935, %v934
  %v939 = vsel %vm387, %v930, 0
  %v942 = vsel %vm387, %v931, 0
  %944 = vmatprep.subr.bf16.mxu0 0
  %945 = vmatpush1.bf16.msra.mxu0 %v936
  %946 = vmatprep.subr.bf16.mxu0 0
  %947 = vmatpush1.bf16.msra.mxu0 0
  %948 = vmatprep.subr.bf16.mxu0 0
  %949 = vmatpush1.bf16.msra.mxu0 0
  %950 = vmatprep.subr.bf16.mxu0 0
  %951 = vmatpush1.bf16.msra.mxu0 0
  %952 = vmatprep.subr.bf16.mxu0 0
  %953 = vmatpush1.bf16.msra.mxu0 0
  %954 = vmatprep.subr.bf16.mxu0 0
  %955 = vmatpush1.bf16.msra.mxu0 0
  %956 = vmatprep.subr.bf16.mxu0 0
  %957 = vmatpush1.bf16.msra.mxu0 0
  %958 = vmatprep.subr.bf16.mxu0 0
  %959 = vmatpush1.bf16.msra.mxu0 0
  %960 = vmatprep.subr.bf16.mxu0 0
  %961 = vmatpush1.bf16.msra.mxu0 0
  %962 = vmatprep.subr.bf16.mxu0 0
  %963 = vmatpush1.bf16.msra.mxu0 0
  %964 = vmatprep.subr.bf16.mxu0 0
  %965 = vmatpush1.bf16.msra.mxu0 0
  %966 = vmatprep.subr.bf16.mxu0 0
  %967 = vmatpush1.bf16.msra.mxu0 0
  %968 = vmatprep.subr.bf16.mxu0 0
  %969 = vmatpush1.bf16.msra.mxu0 0
  %970 = vmatprep.subr.bf16.mxu0 0
  %971 = vmatpush1.bf16.msra.mxu0 0
  %972 = vmatprep.subr.bf16.mxu0 0
  %973 = vmatpush1.bf16.msra.mxu0 0
  %974 = vmatprep.subr.bf16.mxu0 0
  %975 = vmatpush1.bf16.msra.mxu0 0
  %976 = vmatprep.mubr.bf16.mxu0 0
  %977 = vmatmul.mubr.bf16.gmra.mrb[0].mxu0 %v939
  %v978 = vpop.f32.mrb[0].mxu0
  %v979 = vadd.f32 0.0, %v978
  %v980 = vpop.f32.mrb[0].mxu0
  %v981 = vpop.f32.mrb[0].mxu0
  %v982 = vadd.f32 0.0, %v981
  %v983 = vpop.f32.mrb[0].mxu0
  %984 = vmatprep.mubr.bf16.mxu0 0
  %985 = vmatmul.mubr.bf16.gmra.mrb[0].mxu0 %v942
  %v986 = vpop.f32.mrb[0].mxu0
  %v987 = vadd.f32 0.0, %v986
  %v988 = vpop.f32.mrb[0].mxu0
  %v989 = vpop.f32.mrb[0].mxu0
  %v990 = vadd.f32 0.0, %v989
  %v991 = vpop.f32.mrb[0].mxu0
  %992 = vdwg.mxu0
  %v995 = vunpack.c.l.b16 %v27
  %v996 = vunpack.c.l.b16 %v28
  %v997 = vpack.c.b16 %v996, %v995
  %v1000 = vsel %vm387, %v650, 0
  %v1003 = vsel %vm387, %v651, 0
  %1005 = vmatprep.subr.bf16.mxu0 0
  %1006 = vmatpush1.bf16.msra.mxu0 %v997
  %1007 = vmatprep.subr.bf16.mxu0 0
  %1008 = vmatpush1.bf16.msra.mxu0 0
  %1009 = vmatprep.subr.bf16.mxu0 0
  %1010 = vmatpush1.bf16.msra.mxu0 0
  %1011 = vmatprep.subr.bf16.mxu0 0
  %1012 = vmatpush1.bf16.msra.mxu0 0
  %1013 = vmatprep.subr.bf16.mxu0 0
  %1014 = vmatpush1.bf16.msra.mxu0 0
  %1015 = vmatprep.subr.bf16.mxu0 0
  %1016 = vmatpush1.bf16.msra.mxu0 0
  %1017 = vmatprep.subr.bf16.mxu0 0
  %1018 = vmatpush1.bf16.msra.mxu0 0
  %1019 = vmatprep.subr.bf16.mxu0 0
  %1020 = vmatpush1.bf16.msra.mxu0 0
  %1021 = vmatprep.subr.bf16.mxu0 0
  %1022 = vmatpush1.bf16.msra.mxu0 0
  %1023 = vmatprep.subr.bf16.mxu0 0
  %1024 = vmatpush1.bf16.msra.mxu0 0
  %1025 = vmatprep.subr.bf16.mxu0 0
  %1026 = vmatpush1.bf16.msra.mxu0 0
  %1027 = vmatprep.subr.bf16.mxu0 0
  %1028 = vmatpush1.bf16.msra.mxu0 0
  %1029 = vmatprep.subr.bf16.mxu0 0
  %1030 = vmatpush1.bf16.msra.mxu0 0
  %1031 = vmatprep.subr.bf16.mxu0 0
  %1032 = vmatpush1.bf16.msra.mxu0 0
  %1033 = vmatprep.subr.bf16.mxu0 0
  %1034 = vmatpush1.bf16.msra.mxu0 0
  %1035 = vmatprep.subr.bf16.mxu0 0
  %1036 = vmatpush1.bf16.msra.mxu0 0
  %1037 = vmatprep.mubr.bf16.mxu0 0
  %1038 = vmatmul.mubr.bf16.gmra.mrb[0].mxu0 %v1000
  %v1039 = vpop.f32.mrb[0].mxu0
  %v1040 = vadd.f32 %v979, %v1039
  %v1041 = vpop.f32.mrb[0].mxu0
  %v1042 = vpop.f32.mrb[0].mxu0
  %v1043 = vadd.f32 %v982, %v1042
  %v1044 = vpop.f32.mrb[0].mxu0
  %1045 = vmatprep.mubr.bf16.mxu0 0
  %1046 = vmatmul.mubr.bf16.gmra.mrb[0].mxu0 %v1003
  %v1047 = vpop.f32.mrb[0].mxu0
  %v1048 = vadd.f32 %v987, %v1047
  %v1049 = vpop.f32.mrb[0].mxu0
  %v1050 = vpop.f32.mrb[0].mxu0
  %v1051 = vadd.f32 %v990, %v1050
  %v1052 = vpop.f32.mrb[0].mxu0
  %1053 = vdwg.mxu0
  %v1054 = vadd.f32 %v230, %v1040
  %v1055 = vadd.f32 %v231, %v1043
  %v1056 = vadd.f32 %v232, %v1048
  %v1057 = vadd.f32 %v233, %v1051
  %v1058 = vlaneseq
  %v1059 = vshrl.u32 %v1058, 7
  %v1060 = vsub.s32 6, %v1059
  %v1061 = vrot.slane %v55, %v1060
  %v1062 = vadd.f32 %v1054, %v1061
  %v1063 = vadd.f32 %v1055, %v1061
  %v1064 = vadd.f32 %v1056, %v1061
  %v1065 = vadd.f32 %v1057, %v1061
  %v1066 = vsel %vm164, %v1062, 0.0
  %1067 = vadd.xlane.f32.xlu0 %v1066
  %v1068 = vpop.xlane.xlu0 %1067
  %v1069 = vsel %vm164, %v1063, 0.0
  %1070 = vadd.xlane.f32.xlu0 %v1069
  %v1071 = vpop.xlane.xlu0 %1070
  %v1072 = vsel %vm164, %v1064, 0.0
  %1073 = vadd.xlane.f32.xlu0 %v1072
  %v1074 = vpop.xlane.xlu0 %1073
  %v1075 = vsel %vm164, %v1065, 0.0
  %1076 = vadd.xlane.f32.xlu0 %v1075
  %v1077 = vpop.xlane.xlu0 %1076
  %v1078 = vmul.f32 %v1068, %v177
  %v1079 = vmul.f32 %v1071, %v177
  %v1080 = vmul.f32 %v1074, %v177
  %v1081 = vmul.f32 %v1077, %v177
  %v1082 = vsub.f32 %v1062, %v1078
  %v1083 = vsub.f32 %v1063, %v1079
  %v1084 = vsub.f32 %v1064, %v1080
  %v1085 = vsub.f32 %v1065, %v1081
  %v1086 = vmul.f32 %v1082, %v1082
  %v1087 = vmul.f32 %v1083, %v1083
  %v1088 = vmul.f32 %v1084, %v1084
  %v1089 = vmul.f32 %v1085, %v1085
  %v1090 = vsel %vm164, %v1086, 0.0
  %1091 = vadd.xlane.f32.xlu0 %v1090
  %v1092 = vpop.xlane.xlu0 %1091
  %v1093 = vsel %vm164, %v1087, 0.0
  %1094 = vadd.xlane.f32.xlu0 %v1093
  %v1095 = vpop.xlane.xlu0 %1094
  %v1096 = vsel %vm164, %v1088, 0.0
  %1097 = vadd.xlane.f32.xlu0 %v1096
  %v1098 = vpop.xlane.xlu0 %1097
  %v1099 = vsel %vm164, %v1089, 0.0
  %1100 = vadd.xlane.f32.xlu0 %v1099
  %v1101 = vpop.xlane.xlu0 %1100
  %v1102 = vmul.f32 %v1092, %v177
  %v1103 = vmul.f32 %v1095, %v177
  %v1104 = vmul.f32 %v1098, %v177
  %v1105 = vmul.f32 %v1101, %v177
  %v1106 = vadd.f32 %v1102, 1e-05
  %v1107 = vadd.f32 %v1103, 1e-05
  %v1108 = vadd.f32 %v1104, 1e-05
  %v1109 = vadd.f32 %v1105, 1e-05
  %v1110 = vrsqrt.pop %v1106
  %v1111 = vrsqrt.pop %v1107
  %v1112 = vrsqrt.pop %v1108
  %v1113 = vrsqrt.pop %v1109
  %v1114 = vmul.f32 %v1082, %v1110
  %v1115 = vmul.f32 %v1083, %v1111
  %v1116 = vmul.f32 %v1084, %v1112
  %v1117 = vmul.f32 %v1085, %v1113
  %v1118 = vlaneseq
  %v1119 = vshrl.u32 %v1118, 7
  %v1120 = vsub.s32 7, %v1119
  %v1121 = vrot.slane %v55, %v1120
  %v1122 = vmul.f32 %v1114, %v1121
  %v1123 = vmul.f32 %v1115, %v1121
  %v1124 = vmul.f32 %v1116, %v1121
  %v1125 = vmul.f32 %v1117, %v1121
  %v1126 = vlaneseq
  %v1127 = vshrl.u32 %v1126, 7
  %v1128 = vsub.s32 0, %v1127
  %v1129 = vrot.slane %v56, %v1128
  %v1130 = vadd.f32 %v1122, %v1129
  %v1131 = vadd.f32 %v1123, %v1129
  %v1132 = vadd.f32 %v1124, %v1129
  %v1133 = vadd.f32 %v1125, %v1129
  %v1134 = vpack.c.bf16 %v1131, %v1130
  %v1135 = vpack.c.bf16 %v1133, %v1132
  %v1136 = vlaneseq
  %v1137 = vshrl.u32 %v1136, 7
  %v1138 = vsub.s32 1, %v1137
  %v1139 = vrot.slane %v56, %v1138
  %v1144 = vunpack.c.l.b16 %v31
  %v1145 = vunpack.c.l.b16 %v32
  %v1146 = vunpack.c.l.b16 %v33
  %v1147 = vunpack.c.l.b16 %v34
  %v1148 = vpack.c.b16 %v1145, %v1144
  %v1149 = vpack.c.b16 %v1147, %v1146
  %v1153 = vsel %vm164, %v1134, 0
  %v1156 = vsel %vm164, %v1135, 0
  %1158 = vmatprep.subr.bf16.mxu0 0
  %1159 = vmatpush1.bf16.msra.mxu0 %v1148
  %1160 = vmatprep.subr.bf16.mxu0 0
  %1161 = vmatpush1.bf16.msra.mxu0 %v1149
  %1162 = vmatprep.subr.bf16.mxu0 0
  %1163 = vmatpush1.bf16.msra.mxu0 0
  %1164 = vmatprep.subr.bf16.mxu0 0
  %1165 = vmatpush1.bf16.msra.mxu0 0
  %1166 = vmatprep.subr.bf16.mxu0 0
  %1167 = vmatpush1.bf16.msra.mxu0 0
  %1168 = vmatprep.subr.bf16.mxu0 0
  %1169 = vmatpush1.bf16.msra.mxu0 0
  %1170 = vmatprep.subr.bf16.mxu0 0
  %1171 = vmatpush1.bf16.msra.mxu0 0
  %1172 = vmatprep.subr.bf16.mxu0 0
  %1173 = vmatpush1.bf16.msra.mxu0 0
  %1174 = vmatprep.subr.bf16.mxu0 0
  %1175 = vmatpush1.bf16.msra.mxu0 0
  %1176 = vmatprep.subr.bf16.mxu0 0
  %1177 = vmatpush1.bf16.msra.mxu0 0
  %1178 = vmatprep.subr.bf16.mxu0 0
  %1179 = vmatpush1.bf16.msra.mxu0 0
  %1180 = vmatprep.subr.bf16.mxu0 0
  %1181 = vmatpush1.bf16.msra.mxu0 0
  %1182 = vmatprep.subr.bf16.mxu0 0
  %1183 = vmatpush1.bf16.msra.mxu0 0
  %1184 = vmatprep.subr.bf16.mxu0 0
  %1185 = vmatpush1.bf16.msra.mxu0 0
  %1186 = vmatprep.subr.bf16.mxu0 0
  %1187 = vmatpush1.bf16.msra.mxu0 0
  %1188 = vmatprep.subr.bf16.mxu0 0
  %1189 = vmatpush1.bf16.msra.mxu0 0
  %1190 = vmatprep.mubr.bf16.mxu0 0
  %1191 = vmatmul.mubr.bf16.gmra.mrb[0].mxu0 %v1153
  %v1192 = vpop.f32.mrb[0].mxu0
  %v1193 = vadd.f32 %v1139, %v1192
  %v1194 = vpop.f32.mrb[0].mxu0
  %v1195 = vpop.f32.mrb[0].mxu0
  %v1196 = vadd.f32 %v1139, %v1195
  %v1197 = vpop.f32.mrb[0].mxu0
  %1198 = vmatprep.mubr.bf16.mxu0 0
  %1199 = vmatmul.mubr.bf16.gmra.mrb[0].mxu0 %v1156
  %v1200 = vpop.f32.mrb[0].mxu0
  %v1201 = vadd.f32 %v1139, %v1200
  %v1202 = vpop.f32.mrb[0].mxu0
  %v1203 = vpop.f32.mrb[0].mxu0
  %v1204 = vadd.f32 %v1139, %v1203
  %v1205 = vpop.f32.mrb[0].mxu0
  %1206 = vdwg.mxu0
  %v1207 = vmul.f32 %v1193, %v1193
  %v1208 = vmul.f32 %v1196, %v1196
  %v1209 = vmul.f32 %v1201, %v1201
  %v1210 = vmul.f32 %v1204, %v1204
  %v1211 = vmul.f32 %v1193, %v1207
  %v1212 = vmul.f32 %v1196, %v1208
  %v1213 = vmul.f32 %v1201, %v1209
  %v1214 = vmul.f32 %v1204, %v1210
  %v1215 = vmul.f32 %v1211, 0.044715
  %v1216 = vmul.f32 %v1212, 0.044715
  %v1217 = vmul.f32 %v1213, 0.044715
  %v1218 = vmul.f32 %v1214, 0.044715
  %v1219 = vadd.f32 %v1193, %v1215
  %v1220 = vadd.f32 %v1196, %v1216
  %v1221 = vadd.f32 %v1201, %v1217
  %v1222 = vadd.f32 %v1204, %v1218
  %v1223 = vmul.f32 %v1219, 0.7978846
  %v1224 = vmul.f32 %v1220, 0.7978846
  %v1225 = vmul.f32 %v1221, 0.7978846
  %v1226 = vmul.f32 %v1222, 0.7978846
  %v1227 = vtanh.pop %v1223
  %v1228 = vtanh.pop %v1224
  %v1229 = vtanh.pop %v1225
  %v1230 = vtanh.pop %v1226
  %v1231 = vadd.f32 %v1227, 1.0
  %v1232 = vadd.f32 %v1228, 1.0
  %v1233 = vadd.f32 %v1229, 1.0
  %v1234 = vadd.f32 %v1230, 1.0
  %v1235 = vmul.f32 %v1231, 0.5
  %v1236 = vmul.f32 %v1232, 0.5
  %v1237 = vmul.f32 %v1233, 0.5
  %v1238 = vmul.f32 %v1234, 0.5
  %v1239 = vmul.f32 %v1193, %v1235
  %v1240 = vmul.f32 %v1196, %v1236
  %v1241 = vmul.f32 %v1201, %v1237
  %v1242 = vmul.f32 %v1204, %v1238
  %v1243 = vpack.c.bf16 %v1240, %v1239
  %v1244 = vpack.c.bf16 %v1242, %v1241
  %v1245 = vlaneseq
  %v1246 = vshrl.u32 %v1245, 7
  %v1247 = vsub.s32 2, %v1246
  %v1248 = vrot.slane %v56, %v1247
  %v1265 = vunpack.c.l.b16 %v35
  %v1266 = vunpack.c.l.b16 %v36
  %v1267 = vunpack.c.l.b16 %v37
  %v1268 = vunpack.c.l.b16 %v38
  %v1269 = vunpack.c.l.b16 %v39
  %v1270 = vunpack.c.l.b16 %v40
  %v1271 = vunpack.c.l.b16 %v41
  %v1272 = vunpack.c.l.b16 %v42
  %v1273 = vunpack.c.l.b16 %v43
  %v1274 = vunpack.c.l.b16 %v44
  %v1275 = vunpack.c.l.b16 %v45
  %v1276 = vunpack.c.l.b16 %v46
  %v1277 = vunpack.c.l.b16 %v47
  %v1278 = vunpack.c.l.b16 %v48
  %v1279 = vunpack.c.l.b16 %v49
  %v1280 = vunpack.c.l.b16 %v50
  %v1281 = vpack.c.b16 %v1266, %v1265
  %v1282 = vpack.c.b16 %v1268, %v1267
  %v1283 = vpack.c.b16 %v1270, %v1269
  %v1284 = vpack.c.b16 %v1272, %v1271
  %v1285 = vpack.c.b16 %v1274, %v1273
  %v1286 = vpack.c.b16 %v1276, %v1275
  %v1287 = vpack.c.b16 %v1278, %v1277
  %v1288 = vpack.c.b16 %v1280, %v1279
  %1297 = vmatprep.subr.bf16.mxu0 0
  %1298 = vmatpush1.bf16.msra.mxu0 %v1281
  %1299 = vmatprep.subr.bf16.mxu0 0
  %1300 = vmatpush1.bf16.msra.mxu0 %v1282
  %1301 = vmatprep.subr.bf16.mxu0 0
  %1302 = vmatpush1.bf16.msra.mxu0 %v1283
  %1303 = vmatprep.subr.bf16.mxu0 0
  %1304 = vmatpush1.bf16.msra.mxu0 %v1284
  %1305 = vmatprep.subr.bf16.mxu0 0
  %1306 = vmatpush1.bf16.msra.mxu0 %v1285
  %1307 = vmatprep.subr.bf16.mxu0 0
  %1308 = vmatpush1.bf16.msra.mxu0 %v1286
  %1309 = vmatprep.subr.bf16.mxu0 0
  %1310 = vmatpush1.bf16.msra.mxu0 %v1287
  %1311 = vmatprep.subr.bf16.mxu0 0
  %1312 = vmatpush1.bf16.msra.mxu0 %v1288
  %1313 = vmatprep.subr.bf16.mxu0 0
  %1314 = vmatpush1.bf16.msra.mxu0 0
  %1315 = vmatprep.subr.bf16.mxu0 0
  %1316 = vmatpush1.bf16.msra.mxu0 0
  %1317 = vmatprep.subr.bf16.mxu0 0
  %1318 = vmatpush1.bf16.msra.mxu0 0
  %1319 = vmatprep.subr.bf16.mxu0 0
  %1320 = vmatpush1.bf16.msra.mxu0 0
  %1321 = vmatprep.subr.bf16.mxu0 0
  %1322 = vmatpush1.bf16.msra.mxu0 0
  %1323 = vmatprep.subr.bf16.mxu0 0
  %1324 = vmatpush1.bf16.msra.mxu0 0
  %1325 = vmatprep.subr.bf16.mxu0 0
  %1326 = vmatpush1.bf16.msra.mxu0 0
  %1327 = vmatprep.subr.bf16.mxu0 0
  %1328 = vmatpush1.bf16.msra.mxu0 0
  %1329 = vmatprep.mubr.bf16.mxu0 0
  %1330 = vmatmul.mubr.bf16.gmra.mrb[0].mxu0 %v1243
  %v1331 = vpop.f32.mrb[0].mxu0
  %v1332 = vadd.f32 %v1248, %v1331
  %v1333 = vpop.f32.mrb[0].mxu0
  %v1334 = vpop.f32.mrb[0].mxu0
  %v1335 = vadd.f32 %v1248, %v1334
  %v1336 = vpop.f32.mrb[0].mxu0
  %1337 = vmatprep.mubr.bf16.mxu0 0
  %1338 = vmatmul.mubr.bf16.gmra.mrb[0].mxu0 %v1244
  %v1339 = vpop.f32.mrb[0].mxu0
  %v1340 = vadd.f32 %v1248, %v1339
  %v1341 = vpop.f32.mrb[0].mxu0
  %v1342 = vpop.f32.mrb[0].mxu0
  %v1343 = vadd.f32 %v1248, %v1342
  %v1344 = vpop.f32.mrb[0].mxu0
  %1345 = vdwg.mxu0
  %v1346 = vadd.f32 %v1062, %v1332
  %v1347 = vadd.f32 %v1063, %v1335
  %v1348 = vadd.f32 %v1064, %v1340
  %v1349 = vadd.f32 %v1065, %v1343
  %v1350 = vsel %vm164, %v1346, 0.0
  %1351 = vadd.xlane.f32.xlu0 %v1350
  %v1352 = vpop.xlane.xlu0 %1351
  %v1353 = vsel %vm164, %v1347, 0.0
  %1354 = vadd.xlane.f32.xlu0 %v1353
  %v1355 = vpop.xlane.xlu0 %1354
  %v1356 = vsel %vm164, %v1348, 0.0
  %1357 = vadd.xlane.f32.xlu0 %v1356
  %v1358 = vpop.xlane.xlu0 %1357
  %v1359 = vsel %vm164, %v1349, 0.0
  %1360 = vadd.xlane.f32.xlu0 %v1359
  %v1361 = vpop.xlane.xlu0 %1360
  %v1362 = vmul.f32 %v1352, %v177
  %v1363 = vmul.f32 %v1355, %v177
  %v1364 = vmul.f32 %v1358, %v177
  %v1365 = vmul.f32 %v1361, %v177
  %v1366 = vsub.f32 %v1346, %v1362
  %v1367 = vsub.f32 %v1347, %v1363
  %v1368 = vsub.f32 %v1348, %v1364
  %v1369 = vsub.f32 %v1349, %v1365
  %v1370 = vmul.f32 %v1366, %v1366
  %v1371 = vmul.f32 %v1367, %v1367
  %v1372 = vmul.f32 %v1368, %v1368
  %v1373 = vmul.f32 %v1369, %v1369
  %v1374 = vsel %vm164, %v1370, 0.0
  %1375 = vadd.xlane.f32.xlu0 %v1374
  %v1376 = vpop.xlane.xlu0 %1375
  %v1377 = vsel %vm164, %v1371, 0.0
  %1378 = vadd.xlane.f32.xlu0 %v1377
  %v1379 = vpop.xlane.xlu0 %1378
  %v1380 = vsel %vm164, %v1372, 0.0
  %1381 = vadd.xlane.f32.xlu0 %v1380
  %v1382 = vpop.xlane.xlu0 %1381
  %v1383 = vsel %vm164, %v1373, 0.0
  %1384 = vadd.xlane.f32.xlu0 %v1383
  %v1385 = vpop.xlane.xlu0 %1384
  %v1386 = vmul.f32 %v1376, %v177
  %v1387 = vmul.f32 %v1379, %v177
  %v1388 = vmul.f32 %v1382, %v177
  %v1389 = vmul.f32 %v1385, %v177
  %v1390 = vadd.f32 %v1386, 1e-05
  %v1391 = vadd.f32 %v1387, 1e-05
  %v1392 = vadd.f32 %v1388, 1e-05
  %v1393 = vadd.f32 %v1389, 1e-05
  %v1394 = vrsqrt.pop %v1390
  %v1395 = vrsqrt.pop %v1391
  %v1396 = vrsqrt.pop %v1392
  %v1397 = vrsqrt.pop %v1393
  %v1398 = vmul.f32 %v1366, %v1394
  %v1399 = vmul.f32 %v1367, %v1395
  %v1400 = vmul.f32 %v1368, %v1396
  %v1401 = vmul.f32 %v1369, %v1397
  %v1402 = vlaneseq
  %v1403 = vshrl.u32 %v1402, 7
  %v1404 = vsub.s32 3, %v1403
  %v1405 = vrot.slane %v56, %v1404
  %v1406 = vmul.f32 %v1398, %v1405
  %v1407 = vmul.f32 %v1399, %v1405
  %v1408 = vmul.f32 %v1400, %v1405
  %v1409 = vmul.f32 %v1401, %v1405
  %v1410 = vlaneseq
  %v1411 = vshrl.u32 %v1410, 7
  %v1412 = vsub.s32 4, %v1411
  %v1413 = vrot.slane %v56, %v1412
  %v1414 = vadd.f32 %v1406, %v1413
  %v1415 = vadd.f32 %v1407, %v1413
  %v1416 = vadd.f32 %v1408, %v1413
  %v1417 = vadd.f32 %v1409, %v1413
  %v1419 = vsel %vm164, %v65, 0
  %1421 = vmatprep.subr.mxu0 0.0
  %1422 = vmatpush1.msra.mxu0 %v1414
  %1423 = vmatprep.subr.mxu0 0.0
  %1424 = vmatpush1.msra.mxu0 %v1415
  %1425 = vmatprep.subr.mxu0 0.0
  %1426 = vmatpush1.msra.mxu0 %v1416
  %1427 = vmatprep.subr.mxu0 0.0
  %1428 = vmatpush1.msra.mxu0 %v1417
  %1429 = vmatprep.subr.mxu0 0.0
  %1430 = vmatpush1.msra.mxu0 0.0
  %1431 = vmatprep.subr.mxu0 0.0
  %1432 = vmatpush1.msra.mxu0 0.0
  %1433 = vmatprep.subr.mxu0 0.0
  %1434 = vmatpush1.msra.mxu0 0.0
  %1435 = vmatprep.subr.mxu0 0.0
  %1436 = vmatpush1.msra.mxu0 0.0
  %1437 = vmatprep.subr.mxu0 0.0
  %1438 = vmatpush1.msra.mxu0 0.0
  %1439 = vmatprep.subr.mxu0 0.0
  %1440 = vmatpush1.msra.mxu0 0.0
  %1441 = vmatprep.subr.mxu0 0.0
  %1442 = vmatpush1.msra.mxu0 0.0
  %1443 = vmatprep.subr.mxu0 0.0
  %1444 = vmatpush1.msra.mxu0 0.0
  %1445 = vmatprep.subr.mxu0 0.0
  %1446 = vmatpush1.msra.mxu0 0.0
  %1447 = vmatprep.subr.mxu0 0.0
  %1448 = vmatpush1.msra.mxu0 0.0
  %1449 = vmatprep.subr.mxu0 0.0
  %1450 = vmatpush1.msra.mxu0 0.0
  %1451 = vmatprep.subr.mxu0 0.0
  %1452 = vmatpush1.msra.mxu0 0.0
  %1453 = vmatprep.subr.mxu0 0.0
  %1454 = vmatpush1.msra.mxu0 0.0
  %1455 = vmatprep.subr.mxu0 0.0
  %1456 = vmatpush1.msra.mxu0 0.0
  %1457 = vmatprep.subr.mxu0 0.0
  %1458 = vmatpush1.msra.mxu0 0.0
  %1459 = vmatprep.subr.mxu0 0.0
  %1460 = vmatpush1.msra.mxu0 0.0
  %1461 = vmatprep.subr.mxu0 0.0
  %1462 = vmatpush1.msra.mxu0 0.0
  %1463 = vmatprep.subr.mxu0 0.0
  %1464 = vmatpush1.msra.mxu0 0.0
  %1465 = vmatprep.subr.mxu0 0.0
  %1466 = vmatpush1.msra.mxu0 0.0
  %1467 = vmatprep.subr.mxu0 0.0
  %1468 = vmatpush1.msra.mxu0 0.0
  %1469 = vmatprep.subr.mxu0 0.0
  %1470 = vmatpush1.msra.mxu0 0.0
  %1471 = vmatprep.subr.mxu0 0.0
  %1472 = vmatpush1.msra.mxu0 0.0
  %1473 = vmatprep.subr.mxu0 0.0
  %1474 = vmatpush1.msra.mxu0 0.0
  %1475 = vmatprep.subr.mxu0 0.0
  %1476 = vmatpush1.msra.mxu0 0.0
  %1477 = vmatprep.subr.mxu0 0.0
  %1478 = vmatpush1.msra.mxu0 0.0
  %1479 = vmatprep.subr.mxu0 0.0
  %1480 = vmatpush1.msra.mxu0 0.0
  %1481 = vmatprep.subr.mxu0 0.0
  %1482 = vmatpush1.msra.mxu0 0.0
  %1483 = vmatprep.subr.mxu0 0.0
  %1484 = vmatpush1.msra.mxu0 0.0
  %1485 = vmatprep.mubr.f32.mxu0 0.0
  %1486 = vmatmul.mubr.f32.gmra.mrb[0].mxu0 %v1419
  %v1487 = vpop.f32.mrb[0].mxu0
  %v1488 = vadd.f32 0.0, %v1487
  %v1489 = vpop.f32.mrb[0].mxu0
  %1490 = vdwg.mxu0
  %v1491 = vpack.c.bf16 %v1488, %v1488
  %v1492 = vlaneseq
  %v1493 = vshrl.u32 %v1492, 7
  %v1494 = vsub.s32 5, %v1493
  %v1495 = vrot.slane %v56, %v1494
  %v1500 = vunpack.c.l.b16 %v51
  %v1501 = vunpack.c.l.b16 %v52
  %v1502 = vunpack.c.l.b16 %v53
  %v1503 = vunpack.c.l.b16 %v54
  %v1504 = vpack.c.b16 %v1501, %v1500
  %v1505 = vpack.c.b16 %v1503, %v1502
  %v1509 = vsel %vm164, %v1491, 0
  %1511 = vmatprep.subr.bf16.mxu0 0
  %1512 = vmatpush1.bf16.msra.mxu0 %v1504
  %1513 = vmatprep.subr.bf16.mxu0 0
  %1514 = vmatpush1.bf16.msra.mxu0 %v1505
  %1515 = vmatprep.subr.bf16.mxu0 0
  %1516 = vmatpush1.bf16.msra.mxu0 0
  %1517 = vmatprep.subr.bf16.mxu0 0
  %1518 = vmatpush1.bf16.msra.mxu0 0
  %1519 = vmatprep.subr.bf16.mxu0 0
  %1520 = vmatpush1.bf16.msra.mxu0 0
  %1521 = vmatprep.subr.bf16.mxu0 0
  %1522 = vmatpush1.bf16.msra.mxu0 0
  %1523 = vmatprep.subr.bf16.mxu0 0
  %1524 = vmatpush1.bf16.msra.mxu0 0
  %1525 = vmatprep.subr.bf16.mxu0 0
  %1526 = vmatpush1.bf16.msra.mxu0 0
  %1527 = vmatprep.subr.bf16.mxu0 0
  %1528 = vmatpush1.bf16.msra.mxu0 0
  %1529 = vmatprep.subr.bf16.mxu0 0
  %1530 = vmatpush1.bf16.msra.mxu0 0
  %1531 = vmatprep.subr.bf16.mxu0 0
  %1532 = vmatpush1.bf16.msra.mxu0 0
  %1533 = vmatprep.subr.bf16.mxu0 0
  %1534 = vmatpush1.bf16.msra.mxu0 0
  %1535 = vmatprep.subr.bf16.mxu0 0
  %1536 = vmatpush1.bf16.msra.mxu0 0
  %1537 = vmatprep.subr.bf16.mxu0 0
  %1538 = vmatpush1.bf16.msra.mxu0 0
  %1539 = vmatprep.subr.bf16.mxu0 0
  %1540 = vmatpush1.bf16.msra.mxu0 0
  %1541 = vmatprep.subr.bf16.mxu0 0
  %1542 = vmatpush1.bf16.msra.mxu0 0
  %1543 = vmatprep.mubr.bf16.mxu0 0
  %1544 = vmatmul.mubr.bf16.gmra.mrb[0].mxu0 %v1509
  %v1545 = vpop.f32.mrb[0].mxu0
  %v1546 = vadd.f32 %v1495, %v1545
  %v1547 = vpop.f32.mrb[0].mxu0
  %v1548 = vpop.f32.mrb[0].mxu0
  %v1549 = vpop.f32.mrb[0].mxu0
  %1550 = vdwg.mxu0
  %1551 = vst [vmem:[%s3] sm:$0xff] %v1546
  // Predicated region
  $region14: #{swin_classifier_forward.1} parent=0 // pred_check
    _
  $region15: #{swin_classifier_forward.1} parent=0 // pred_check_branch
    %1553 = sbr.rel (0) target = $region17
  $region16: #{swin_classifier_forward.1} parent=0 // pred_region
    _
  $region17: #{swin_classifier_forward.1} parent=0 // pred_fallthru
    _
  // Predicated region
  $region18: #{swin_classifier_forward.1} parent=0 // pred_check
    _
  $region19: #{swin_classifier_forward.1} parent=0 // pred_check_branch
    %1555 = sbr.rel (0) target = $region21
  $region20: #{swin_classifier_forward.1} parent=0 // pred_region
    _
  $region21: #{swin_classifier_forward.1} parent=0 // pred_fallthru
    _

</llo_original>
